<compile_context>
chip_gen: v6e
topology: v6e:2x2x1
jax: 0.10.0
libtpu: 0.0.40
codegen_flags: <defaults>
</compile_context>

<pallas_src>
import math
import numpy as np
import jax
import jax.numpy as jnp
from jax import lax
from jax.experimental import pallas as pl
from jax.experimental.pallas import tpu as pltpu

# ----------------------------- configuration --------------------------------
ORIG_SR = 16000
SUPER_SR = 48000
SCALE = SUPER_SR / ORIG_SR            # 3.0
PRE_NFFT = 32                         # "pre_nfft"  (mel analysis)
PRE_HOP = 8
POST_NFFT = 64                        # "post_nfft" (mixing / istft)
POST_HOP = 16
N_MELS = 8
HIDDEN = 16
UPSAMPLE = PRE_HOP                    # vocoder samples per mel frame (stand-in)
ENERGY_THR = 0.99
TRANSITION_MS = 1                     # reference default is 100 ms; 1 ms keeps
                                      # transition_len << T_super at toy sizes
INV_INT16 = 1.0 / 32768.0

F_PRE = PRE_NFFT // 2 + 1             # 17
F_POST = POST_NFFT // 2 + 1           # 33
FP_PAD = 24                           # F_PRE  padded to a sublane multiple
FQ_PAD = 40                           # F_POST padded to a sublane multiple
K_PRE = PRE_NFFT // PRE_HOP           # 4
K_POST = POST_NFFT // POST_HOP        # 4

MAX_FRAME_TILE = 2048                 # frames per grid step (lane axis)
VMEM_LIMIT = 32 * 1024 * 1024         # safe on v5e/v6e/v7x


# ------------------------------ small helpers --------------------------------
def _round_up(n, m):
    return ((n + m - 1) // m) * m


def _cparams(semantics):
    return pltpu.CompilerParams(dimension_semantics=semantics,
                                vmem_limit_bytes=VMEM_LIMIT)


def _frames_from_poly(cur, nxt, hop, k):
    """Rebuild (k*hop, tile) frames from the current + next polyphase column
    tiles entirely in VMEM (lane rolls instead of an HBM gather)."""
    tile = cur.shape[1]
    cat = jnp.concatenate([cur, nxt], axis=1)          # (hop, 2*tile)
    width = 2 * tile
    pieces = [cur]
    for s in range(1, k):
        # roll left by s columns, keep the first `tile` columns -> cat[:, s:s+tile]
        pieces.append(pltpu.roll(cat, width - s, 1)[:, :tile])
    return jnp.concatenate(pieces, axis=0)              # (k*hop, tile)


# ----------------------------- pallas kernels -------------------------------
def _pre_fused_kernel(cur_ref, nxt_ref, basisw_ref, fbank_ref, w0_ref, b0_ref,
                      wv_ref, bv_ref, out_ref):
    # In-kernel framing -> windowed DFT -> |.| -> mel fbank -> log -> MLP.
    frames = _frames_from_poly(cur_ref[...], nxt_ref[...], PRE_HOP, K_PRE)
    spec = jnp.dot(basisw_ref[...], frames,
                   preferred_element_type=jnp.float32)          # (2*FP_PAD, T)
    re = spec[:FP_PAD, :]
    im = spec[FP_PAD:, :]
    mag = jnp.sqrt(re * re + im * im)
    mel = jnp.log(jnp.maximum(
        jnp.dot(fbank_ref[...], mag, preferred_element_type=jnp.float32), 1e-5))
    # TODO(synk): external MossFormer2-SR + vocoder submodules replaced by a
    # deterministic 2-layer (relu -> tanh) stand-in mapping mel frames to
    # UPSAMPLE waveform samples per frame.
    h = jnp.maximum(
        jnp.dot(w0_ref[...], mel, preferred_element_type=jnp.float32)
        + b0_ref[...], 0.0)
    y = jnp.dot(wv_ref[...], h, preferred_element_type=jnp.float32) + bv_ref[...]
    out_ref[...] = jnp.tanh(y)


def _make_energy_kernel(tile, n_frames):
    def kernel(cur_ref, nxt_ref, basisw_ref, e_ref):
        frames = _frames_from_poly(cur_ref[...], nxt_ref[...], POST_HOP, K_POST)
        spec = jnp.dot(basisw_ref[...], frames,
                       preferred_element_type=jnp.float32)      # (2*FQ_PAD, T)
        col = (lax.broadcasted_iota(jnp.int32, spec.shape, 1)
               + pl.program_id(0) * tile)
        valid = (col < n_frames).astype(jnp.float32)
        esum = jnp.sum(spec * spec * valid, axis=-1, keepdims=True)
        # per-tile partial sums; "parallel"-safe (reduced in plain JAX).
        e_ref[...] = jnp.broadcast_to(esum, (2 * FQ_PAD, 128))
    return kernel


def _make_post_fused_kernel(tile, n_frames):
    def kernel(cur_a, nxt_a, cur_b, nxt_b, mask_ref, basisw_ref, inv_ref,
               ola_ref, carry_ref):
        # frames for both streams, lane-stacked so the (80,64) basis is pushed once
        fa = _frames_from_poly(cur_a[...], nxt_a[...], POST_HOP, K_POST)
        fb = _frames_from_poly(cur_b[...], nxt_b[...], POST_HOP, K_POST)
        fab = jnp.concatenate([fa, fb], axis=1)                  # (64, 2*tile)
        spec = jnp.dot(basisw_ref[...], fab,
                       preferred_element_type=jnp.float32)       # (80, 2*tile)
        m = mask_ref[...]                                        # (80, 1)
        mix = spec[:, :tile] * m + spec[:, tile:] * (1.0 - m)
        frames_mix = jnp.dot(inv_ref[...], mix,
                             preferred_element_type=jnp.float32) # (64, tile)

        # overlap-add of the k=4 hop streams with lane rolls; spill into the
        # next tile's first 3 columns is emitted as a small carry output.
        col = lax.broadcasted_iota(jnp.int32, (POST_HOP, tile), 1)
        valid = ((col + pl.program_id(0) * tile) < n_frames).astype(jnp.float32)
        acc = frames_mix[:POST_HOP, :] * valid
        spill = jnp.zeros((POST_HOP, tile), jnp.float32)
        for s in range(1, K_POST):
            st = frames_mix[s * POST_HOP:(s + 1) * POST_HOP, :] * valid
            r = pltpu.roll(st, s, 1)
            acc = acc + jnp.where(col >= s, r, 0.0)
            spill = spill + jnp.where(col < s, r, 0.0)
        ola_ref[...] = acc
        carry_ref[...] = spill[:, :128]
    return kernel


def _make_crossfade_kernel(tile, trans_len):
    inv_lm1 = 1.0 / float(max(trans_len - 1, 1))
    pad = POST_NFFT // 2
    def kernel(orig_ref, ola_ref, invw_ref, out_ref):
        # fade ramp synthesized in-kernel from the global sample index;
        # 1/win_sum normalization folded; int16 produced directly.
        r = lax.broadcasted_iota(jnp.int32, (POST_HOP, tile), 0)
        c = (lax.broadcasted_iota(jnp.int32, (POST_HOP, tile), 1)
             + pl.program_id(0) * tile)
        t = c * POST_HOP + r - pad
        f = jnp.clip(t.astype(jnp.float32) * inv_lm1, 0.0, 1.0)
        s = orig_ref[...] * (1.0 - f) + ola_ref[...] * invw_ref[...] * f
        out_ref[...] = (jnp.clip(s, -1.0, 1.0) * 32767.0).astype(jnp.int16)
    return kernel


# ----------------------------- parameter setup ------------------------------
def _hann(nfft):
    n = np.arange(nfft, dtype=np.float64)
    return (0.5 - 0.5 * np.cos(2.0 * np.pi * n / nfft)).astype(np.float32)


def _stacked_dft_bases(nfft, fpad):
    """Forward basis (2*fpad, nfft) with analysis window folded in, and the
    inverse basis (nfft, 2*fpad) with the synthesis window folded in."""
    nfreq = nfft // 2 + 1
    k = np.arange(nfft)
    f = np.arange(nfreq)
    ang = 2.0 * np.pi * np.outer(f, k) / nfft
    cosb = np.cos(ang)
    sinb = -np.sin(ang)
    win = _hann(nfft).astype(np.float64)

    fwd = np.zeros((2 * fpad, nfft), np.float32)
    fwd[:nfreq] = (cosb * win[None, :]).astype(np.float32)
    fwd[fpad:fpad + nfreq] = (sinb * win[None, :]).astype(np.float32)

    w = np.full((nfreq,), 2.0)
    w[0] = 1.0
    w[-1] = 1.0
    wc = (cosb * w[:, None] / nfft).T                  # (nfft, nfreq)
    ws = (sinb * w[:, None] / nfft).T
    inv = np.zeros((nfft, 2 * fpad), np.float32)
    inv[:, :nfreq] = (wc * win[:, None]).astype(np.float32)
    inv[:, fpad:fpad + nfreq] = (ws * win[:, None]).astype(np.float32)
    return fwd, inv


def _mel_fbank(n_mels, n_freqs, sample_rate, f_min=0.0, f_max=8000.0):
    # TODO(synk): deterministic triangular filterbank stand-in for
    # torchaudio.functional.melscale_fbanks(..., 'slaney', 'slaney').
    def hz2mel(f): return 2595.0 * np.log10(1.0 + f / 700.0)
    def mel2hz(m): return 700.0 * (10.0 ** (m / 2595.0) - 1.0)
    freqs = np.linspace(0.0, sample_rate / 2.0, n_freqs)
    mpts = np.linspace(hz2mel(f_min), hz2mel(f_max), n_mels + 2)
    fpts = mel2hz(mpts)
    fb = np.zeros((n_mels, n_freqs), np.float32)
    for i in range(n_mels):
        lo, ce, hi = fpts[i], fpts[i + 1], fpts[i + 2]
        up = (freqs - lo) / max(ce - lo, 1e-6)
        dn = (hi - freqs) / max(hi - ce, 1e-6)
        fb[i] = np.maximum(0.0, np.minimum(up, dn)).astype(np.float32)
    return fb


def make_params(key):
    k0, k1 = jax.random.split(key, 2)
    fwd_pre, _ = _stacked_dft_bases(PRE_NFFT, FP_PAD)
    fwd_post, inv_post = _stacked_dft_bases(POST_NFFT, FQ_PAD)
    fb = np.zeros((N_MELS, FP_PAD), np.float32)
    fb[:, :F_PRE] = _mel_fbank(N_MELS, F_PRE, SUPER_SR)
    step = SUPER_SR / POST_NFFT
    win_post = _hann(POST_NFFT)
    return {
        "fbank": jnp.asarray(fb),                                    # (8, FP_PAD)
        "w0": 0.1 * jax.random.normal(k0, (HIDDEN, N_MELS), jnp.float32),
        "b0": jnp.zeros((HIDDEN, 1), jnp.float32),
        "wv": 0.1 * jax.random.normal(k1, (UPSAMPLE, HIDDEN), jnp.float32),
        "bv": jnp.zeros((UPSAMPLE, 1), jnp.float32),
        "basis_pre": jnp.asarray(fwd_pre),                           # (2*FP_PAD, 32)
        "basis_post": jnp.asarray(fwd_post),                         # (2*FQ_PAD, 64)
        "inv_post": jnp.asarray(inv_post),                           # (64, 2*FQ_PAD)
        "freq_vec": jnp.asarray((np.arange(F_POST) * step).astype(np.float32)),
        # post_istft.inv_win_sum_for_mossformer (stand-in, constant)
        "inv_win_sum": float(1.0 / float(np.sum(win_post.astype(np.float64) ** 2))),
        "win_post_np": win_post,                                     # trace-time numpy
    }


# ------------------------------- glue helpers --------------------------------
def _linear_interpolate(x, scale):
    # torch.nn.functional.interpolate(mode='linear', align_corners=False)
    t_in = x.shape[0]
    t_out = int(math.floor(t_in * scale))
    j = jnp.arange(t_out, dtype=jnp.float32)
    src = jnp.clip((j + 0.5) / scale - 0.5, 0.0, float(t_in - 1))
    i0 = jnp.floor(src).astype(jnp.int32)
    i1 = jnp.minimum(i0 + 1, t_in - 1)
    frac = src - i0.astype(jnp.float32)
    return x[i0] * (1.0 - frac) + x[i1] * frac


def _plan_frames(t, nfft, hop):
    pad = nfft // 2
    n_frames = (t + 2 * pad - nfft) // hop + 1
    tile = min(MAX_FRAME_TILE, _round_up(n_frames, 128))
    n_pad = _round_up(n_frames, tile)
    assert tile % 128 == 0 and n_pad % tile == 0
    return n_frames, n_pad, tile


def _polyphase(sig, nfft, hop, n_pad, tile):
    """Center-padded polyphase layout (hop, n_pad + tile): column c holds
    padded[c*hop:(c+1)*hop].  1x the signal size (no frame duplication); the
    extra `tile` zero columns provide the last grid step's halo block."""
    pad = nfft // 2
    total_cols = n_pad + tile
    total_len = total_cols * hop
    padded = jnp.pad(sig, (pad, total_len - sig.shape[0] - pad))
    return padded.reshape(total_cols, hop).T


def _invw_poly_np(win, hop, n_frames, n_cols):
    """1 / iSTFT window-sum in polyphase layout (hop, n_cols), numpy at trace
    time.  TODO(synk): trace-time constant scales with audio length."""
    nfft = win.shape[0]
    k = nfft // hop
    w2 = (win.astype(np.float64) ** 2).reshape(k, hop)
    acc = np.zeros((n_cols + k, hop), np.float64)
    for j in range(k):
        acc[j:j + n_frames] += w2[j][None, :]
    inv = 1.0 / np.maximum(acc[:n_cols], 1e-8)
    return inv.T.astype(np.float32)


# --------------------------- pallas_call wrappers ----------------------------
def _call_pre(poly, n_pad, tile, params):
    const = lambda i: (0, 0)
    return pl.pallas_call(
        _pre_fused_kernel,
        out_shape=jax.ShapeDtypeStruct((UPSAMPLE, n_pad), jnp.float32),
        grid=(n_pad // tile,),
        in_specs=[
            pl.BlockSpec((PRE_HOP, tile), lambda i: (0, i)),
            pl.BlockSpec((PRE_HOP, tile), lambda i: (0, i + 1)),
            pl.BlockSpec((2 * FP_PAD, PRE_NFFT), const),
            pl.BlockSpec((N_MELS, FP_PAD), const),
            pl.BlockSpec((HIDDEN, N_MELS), const),
            pl.BlockSpec((HIDDEN, 1), const),
            pl.BlockSpec((UPSAMPLE, HIDDEN), const),
            pl.BlockSpec((UPSAMPLE, 1), const),
        ],
        out_specs=pl.BlockSpec((UPSAMPLE, tile), lambda i: (0, i)),
        compiler_params=_cparams(("parallel",)),
    )(poly, poly, params["basis_pre"], params["fbank"],
      params["w0"], params["b0"], params["wv"], params["bv"])


def _call_energy(poly_a, n_pad, tile, n_frames, basis):
    const = lambda i: (0, 0)
    n_tiles = n_pad // tile
    return pl.pallas_call(
        _make_energy_kernel(tile, n_frames),
        out_shape=jax.ShapeDtypeStruct((2 * FQ_PAD, n_tiles * 128), jnp.float32),
        grid=(n_tiles,),
        in_specs=[
            pl.BlockSpec((POST_HOP, tile), lambda i: (0, i)),
            pl.BlockSpec((POST_HOP, tile), lambda i: (0, i + 1)),
            pl.BlockSpec((2 * FQ_PAD, POST_NFFT), const),
        ],
        out_specs=pl.BlockSpec((2 * FQ_PAD, 128), lambda i: (0, i)),
        compiler_params=_cparams(("parallel",)),
    )(poly_a, poly_a, basis)


def _call_post_fused(poly_a, poly_b, mask, n_pad, tile, n_frames, params):
    const = lambda i: (0, 0)
    n_tiles = n_pad // tile
    return pl.pallas_call(
        _make_post_fused_kernel(tile, n_frames),
        out_shape=(jax.ShapeDtypeStruct((POST_HOP, n_pad), jnp.float32),
                   jax.ShapeDtypeStruct((POST_HOP, n_tiles * 128), jnp.float32)),
        grid=(n_tiles,),
        in_specs=[
            pl.BlockSpec((POST_HOP, tile), lambda i: (0, i)),
            pl.BlockSpec((POST_HOP, tile), lambda i: (0, i + 1)),
            pl.BlockSpec((POST_HOP, tile), lambda i: (0, i)),
            pl.BlockSpec((POST_HOP, tile), lambda i: (0, i + 1)),
            pl.BlockSpec((2 * FQ_PAD, 1), const),
            pl.BlockSpec((2 * FQ_PAD, POST_NFFT), const),
            pl.BlockSpec((POST_NFFT, 2 * FQ_PAD), const),
        ],
        out_specs=(pl.BlockSpec((POST_HOP, tile), lambda i: (0, i)),
                   pl.BlockSpec((POST_HOP, 128), lambda i: (0, i))),
        compiler_params=_cparams(("parallel",)),
    )(poly_a, poly_a, poly_b, poly_b, mask,
      params["basis_post"], params["inv_post"])


def _call_crossfade(poly_a, ola, invw_poly, n_pad, tile, trans_len):
    return pl.pallas_call(
        _make_crossfade_kernel(tile, trans_len),
        out_shape=jax.ShapeDtypeStruct((POST_HOP, n_pad), jnp.int16),
        grid=(n_pad // tile,),
        in_specs=[
            pl.BlockSpec((POST_HOP, tile), lambda i: (0, i)),
            pl.BlockSpec((POST_HOP, tile), lambda i: (0, i)),
            pl.BlockSpec((POST_HOP, tile), lambda i: (0, i)),
        ],
        out_specs=pl.BlockSpec((POST_HOP, tile), lambda i: (0, i)),
        compiler_params=_cparams(("parallel",)),
    )(poly_a, ola, invw_poly)


# ------------------------------- forward pass --------------------------------
def mossformer_sr_forward(audio_i16, params):
    assert audio_i16.shape[0] == 1 and audio_i16.shape[1] == 1
    x = audio_i16.astype(jnp.float32).reshape(-1) * INV_INT16
    orig_res = _linear_interpolate(x, SCALE)                        # (T_super,)
    t_super = orig_res.shape[0]

    # ---- pre path: in-kernel framing + STFT -> mel -> MLP stand-in ----
    n_pre, np_pad, tile_pre = _plan_frames(t_super, PRE_NFFT, PRE_HOP)
    poly_pre = _polyphase(orig_res, PRE_NFFT, PRE_HOP, np_pad, tile_pre)
    voc = _call_pre(poly_pre, np_pad, tile_pre, params)             # (8, np_pad)
    generated = jnp.transpose(voc[:, :n_pre]).reshape(-1)[:t_super]

    # ---- post path polyphase inputs ----
    n_post, nq_pad, tile_post = _plan_frames(t_super, POST_NFFT, POST_HOP)
    n_tiles = nq_pad // tile_post
    poly_a = _polyphase(orig_res, POST_NFFT, POST_HOP, nq_pad, tile_post)
    poly_b = _polyphase(generated, POST_NFFT, POST_HOP, nq_pad, tile_post)

    # ---- energy-only pass (parallel partial sums) + band mask (tiny JAX) ----
    e_part = _call_energy(poly_a, nq_pad, tile_post, n_post, params["basis_post"])
    e_vec = jnp.sum(e_part.reshape(2 * FQ_PAD, n_tiles, 128)[:, :, 0], axis=1)
    e_f = (e_vec[:F_POST] + e_vec[FQ_PAD:FQ_PAD + F_POST]) * params["inv_win_sum"]
    cum = jnp.cumsum(e_f)
    ratio = cum / (cum[-1] + 1e-6)
    idx_hi = jnp.argmax((ratio >= ENERGY_THR).astype(jnp.uint8))
    f_high = params["freq_vec"][idx_hi]
    lp = (params["freq_vec"] <= f_high).astype(jnp.float32)          # (F_POST,)
    lp_pad = jnp.zeros((FQ_PAD,), jnp.float32).at[:F_POST].set(lp)
    mask = jnp.concatenate([lp_pad, lp_pad]).reshape(2 * FQ_PAD, 1)

    # ---- fused STFT-A/STFT-B -> band mix -> windowed iDFT -> in-kernel OLA ----
    ola, carry = _call_post_fused(poly_a, poly_b, mask, nq_pad, tile_post,
                                  n_post, params)
    if n_tiles > 1:
        # add each tile's 3-column spill into the next tile's head (tiny).
        carr = carry.reshape(POST_HOP, n_tiles, 128)[:, :-1, :3]
        corr = jnp.zeros((POST_HOP, n_tiles, tile_post), jnp.float32)
        corr = corr.at[:, 1:, :3].set(carr).reshape(POST_HOP, nq_pad)
        ola = ola + corr

    # ---- crossfade + 1/win_sum + clamp + int16, in polyphase layout ----
    trans_len = min(int(round(TRANSITION_MS * SUPER_SR * 0.001)), t_super)
    invw_poly = jnp.asarray(
        _invw_poly_np(params["win_post_np"], POST_HOP, n_post, nq_pad))
    out_poly = _call_crossfade(poly_a, ola, invw_poly, nq_pad, tile_post,
                               trans_len)                            # int16

    pad = POST_NFFT // 2
    out = jnp.transpose(out_poly).reshape(-1)[pad:pad + t_super]
    return out.reshape(1, 1, t_super)


# ----------------------------------- main ------------------------------------
if __name__ == "__main__":
    key = jax.random.PRNGKey(0)
    k_audio, k_params = jax.random.split(key)

    T_IN = 160                                   # small int16 waveform (1, 1, T)
    audio_f = jax.random.uniform(k_audio, (1, 1, T_IN), jnp.float32, -1.0, 1.0)
    audio_i16 = (audio_f * 3000.0).astype(jnp.int16)

    params = make_params(k_params)

    fwd = jax.jit(lambda a: mossformer_sr_forward(a, params))
    out = jax.block_until_ready(fwd(audio_i16))

    t_super = T_IN * SUPER_SR // ORIG_SR
    assert out.shape == (1, 1, t_super), out.shape
    assert out.dtype == jnp.int16, out.dtype
    assert bool(jnp.all(jnp.isfinite(out.astype(jnp.float32))))
    print("KERNEL_OK")
</pallas_src>

<mosaic_0001>
module attributes {stable_mosaic.version = 11 : i64} {
  func.func @kernel(%arg0: i32, %arg1: memref<16x128xf32, #tpu.memory_space<vmem>>, %arg2: memref<16x128xf32, #tpu.memory_space<vmem>>, %arg3: memref<80x64xf32, #tpu.memory_space<vmem>>, %arg4: memref<80x128xf32, #tpu.memory_space<vmem>>) attributes {dimension_semantics = [#tpu.dimension_semantics<parallel>], iteration_bounds = array<i64: 1>, scalar_prefetch = 0 : i64, scratch_operands = 0 : i64, tpu.core_type = #tpu.core_type<tc>, window_params = [{transform_indices = @transform_0, window_bounds = array<i64: 16, 128>}, {transform_indices = @transform_1, window_bounds = array<i64: 16, 128>}, {pipeline_mode = #tpu.pipeline_mode<synchronous>, transform_indices = @transform_2, window_bounds = array<i64: 80, 64>}, {transform_indices = @transform_3, window_bounds = array<i64: 80, 128>}]} {
    %c0 = arith.constant 0 : index
    %c0_0 = arith.constant 0 : index
    %0 = vector.load %arg1[%c0, %c0_0] : memref<16x128xf32, #tpu.memory_space<vmem>>, vector<16x128xf32>
    %c0_1 = arith.constant 0 : index
    %c0_2 = arith.constant 0 : index
    %1 = vector.load %arg2[%c0_1, %c0_2] : memref<16x128xf32, #tpu.memory_space<vmem>>, vector<16x128xf32>
    %2 = tpu.concatenate %0, %1 in 1 : vector<16x128xf32>, vector<16x128xf32> -> vector<16x256xf32>
    %c255_i32 = arith.constant 255 : i32
    %3 = tpu.dynamic_rotate %2 by %c255_i32 dim 1 : vector<16x256xf32>, i32 -> vector<16x256xf32>
    %4 = vector.extract_strided_slice %3 {offsets = [0, 0], sizes = [16, 128], strides = [1, 1]} : vector<16x256xf32> to vector<16x128xf32>
    %c254_i32 = arith.constant 254 : i32
    %5 = tpu.dynamic_rotate %2 by %c254_i32 dim 1 : vector<16x256xf32>, i32 -> vector<16x256xf32>
    %6 = vector.extract_strided_slice %5 {offsets = [0, 0], sizes = [16, 128], strides = [1, 1]} : vector<16x256xf32> to vector<16x128xf32>
    %c253_i32 = arith.constant 253 : i32
    %7 = tpu.dynamic_rotate %2 by %c253_i32 dim 1 : vector<16x256xf32>, i32 -> vector<16x256xf32>
    %8 = vector.extract_strided_slice %7 {offsets = [0, 0], sizes = [16, 128], strides = [1, 1]} : vector<16x256xf32> to vector<16x128xf32>
    %9 = tpu.concatenate %0, %4, %6, %8 in 0 : vector<16x128xf32>, vector<16x128xf32>, vector<16x128xf32>, vector<16x128xf32> -> vector<64x128xf32>
    %c0_3 = arith.constant 0 : index
    %c0_4 = arith.constant 0 : index
    %10 = vector.load %arg3[%c0_3, %c0_4] : memref<80x64xf32, #tpu.memory_space<vmem>>, vector<80x64xf32>
    %cst = arith.constant dense<0.000000e+00> : vector<80x128xf32>
    %11 = tpu.matmul %10, %9, %cst {dimension_numbers = #tpu.dot_dimension_numbers<[1], [0], [0], [1], [0, 0, 1, 1], [], []>} : vector<80x64xf32>, vector<64x128xf32>, vector<80x128xf32> -> vector<80x128xf32>
    %12 = tpu.iota {dimensions = array<i32: 1>} : vector<80x128xi32>
    %c128_i32 = arith.constant 128 : i32
    %13 = arith.muli %arg0, %c128_i32 : i32
    %14 = vector.broadcast %13 : i32 to vector<80x128xi32>
    %15 = arith.addi %12, %14 : vector<80x128xi32>
    %c31_i32 = arith.constant 31 : i32
    %16 = vector.broadcast %c31_i32 : i32 to vector<80x128xi32>
    %17 = arith.cmpi slt, %15, %16 : vector<80x128xi32>
    %18 = arith.extui %17 : vector<80x128xi1> to vector<80x128xi32>
    %19 = arith.sitofp %18 : vector<80x128xi32> to vector<80x128xf32>
    %20 = arith.mulf %11, %11 : vector<80x128xf32>
    %21 = arith.mulf %20, %19 : vector<80x128xf32>
    %cst_5 = arith.constant dense<0.000000e+00> : vector<80xf32>
    %22 = vector.multi_reduction <add>, %21, %cst_5 [1] : vector<80x128xf32> to vector<80xf32>
    %23 = vector.shape_cast %22 : vector<80xf32> to vector<80x1xf32>
    %24 = vector.shape_cast %23 : vector<80x1xf32> to vector<80x1xf32>
    %25 = vector.broadcast %24 : vector<80x1xf32> to vector<80x128xf32>
    %c0_6 = arith.constant 0 : index
    %c0_7 = arith.constant 0 : index
    %26 = vector.load %arg4[%c0_6, %c0_7] : memref<80x128xf32, #tpu.memory_space<vmem>>, vector<80x128xf32>
    tpu.vector_store %arg4[%c0_6, %c0_7], %25 {strides = array<i32>} : memref<80x128xf32, #tpu.memory_space<vmem>>, vector<80x128xf32>,
    return
  }
  func.func @transform_0(%arg0: i32) -> (i32, i32) {
    %c0_i32 = arith.constant 0 : i32
    %c0_i32_0 = arith.constant 0 : i32
    return %c0_i32, %arg0 : i32, i32
  }
  func.func @transform_1(%arg0: i32) -> (i32, i32) {
    %c1_i32 = arith.constant 1 : i32
    %0 = arith.addi %arg0, %c1_i32 : i32
    %c0_i32 = arith.constant 0 : i32
    %c0_i32_0 = arith.constant 0 : i32
    return %c0_i32, %0 : i32, i32
  }
  func.func @transform_2(%arg0: i32) -> (i32, i32) {
    %c0_i32 = arith.constant 0 : i32
    %c0_i32_0 = arith.constant 0 : i32
    %c0_i32_1 = arith.constant 0 : i32
    return %c0_i32, %c0_i32_0 : i32, i32
  }
  func.func @transform_3(%arg0: i32) -> (i32, i32) {
    %c0_i32 = arith.constant 0 : i32
    %c0_i32_0 = arith.constant 0 : i32
    return %c0_i32, %arg0 : i32, i32
  }
}

module attributes {stable_mosaic.version = 11 : i64} {
  func.func @_pre_fused_kernel(%arg0: i32, %arg1: memref<8x128xf32, #tpu.memory_space<vmem>>, %arg2: memref<8x128xf32, #tpu.memory_space<vmem>>, %arg3: memref<48x32xf32, #tpu.memory_space<vmem>>, %arg4: memref<8x24xf32, #tpu.memory_space<vmem>>, %arg5: memref<16x8xf32, #tpu.memory_space<vmem>>, %arg6: memref<16x1xf32, #tpu.memory_space<vmem>>, %arg7: memref<8x16xf32, #tpu.memory_space<vmem>>, %arg8: memref<8x1xf32, #tpu.memory_space<vmem>>, %arg9: memref<8x128xf32, #tpu.memory_space<vmem>>) attributes {dimension_semantics = [#tpu.dimension_semantics<parallel>], iteration_bounds = array<i64: 1>, scalar_prefetch = 0 : i64, scratch_operands = 0 : i64, tpu.core_type = #tpu.core_type<tc>, window_params = [{transform_indices = @transform_0, window_bounds = array<i64: 8, 128>}, {transform_indices = @transform_1, window_bounds = array<i64: 8, 128>}, {pipeline_mode = #tpu.pipeline_mode<synchronous>, transform_indices = @transform_2, window_bounds = array<i64: 48, 32>}, {pipeline_mode = #tpu.pipeline_mode<synchronous>, transform_indices = @transform_3, window_bounds = array<i64: 8, 24>}, {pipeline_mode = #tpu.pipeline_mode<synchronous>, transform_indices = @transform_4, window_bounds = array<i64: 16, 8>}, {pipeline_mode = #tpu.pipeline_mode<synchronous>, transform_indices = @transform_5, window_bounds = array<i64: 16, 1>}, {pipeline_mode = #tpu.pipeline_mode<synchronous>, transform_indices = @transform_6, window_bounds = array<i64: 8, 16>}, {pipeline_mode = #tpu.pipeline_mode<synchronous>, transform_indices = @transform_7, window_bounds = array<i64: 8, 1>}, {transform_indices = @transform_8, window_bounds = array<i64: 8, 128>}]} {
    %c0 = arith.constant 0 : index
    %c0_0 = arith.constant 0 : index
    %0 = vector.load %arg1[%c0, %c0_0] : memref<8x128xf32, #tpu.memory_space<vmem>>, vector<8x128xf32>
    %c0_1 = arith.constant 0 : index
    %c0_2 = arith.constant 0 : index
    %1 = vector.load %arg2[%c0_1, %c0_2] : memref<8x128xf32, #tpu.memory_space<vmem>>, vector<8x128xf32>
    %2 = tpu.concatenate %0, %1 in 1 : vector<8x128xf32>, vector<8x128xf32> -> vector<8x256xf32>
    %c255_i32 = arith.constant 255 : i32
    %3 = tpu.dynamic_rotate %2 by %c255_i32 dim 1 : vector<8x256xf32>, i32 -> vector<8x256xf32>
    %4 = vector.extract_strided_slice %3 {offsets = [0, 0], sizes = [8, 128], strides = [1, 1]} : vector<8x256xf32> to vector<8x128xf32>
    %c254_i32 = arith.constant 254 : i32
    %5 = tpu.dynamic_rotate %2 by %c254_i32 dim 1 : vector<8x256xf32>, i32 -> vector<8x256xf32>
    %6 = vector.extract_strided_slice %5 {offsets = [0, 0], sizes = [8, 128], strides = [1, 1]} : vector<8x256xf32> to vector<8x128xf32>
    %c253_i32 = arith.constant 253 : i32
    %7 = tpu.dynamic_rotate %2 by %c253_i32 dim 1 : vector<8x256xf32>, i32 -> vector<8x256xf32>
    %8 = vector.extract_strided_slice %7 {offsets = [0, 0], sizes = [8, 128], strides = [1, 1]} : vector<8x256xf32> to vector<8x128xf32>
    %9 = tpu.concatenate %0, %4, %6, %8 in 0 : vector<8x128xf32>, vector<8x128xf32>, vector<8x128xf32>, vector<8x128xf32> -> vector<32x128xf32>
    %c0_3 = arith.constant 0 : index
    %c0_4 = arith.constant 0 : index
    %10 = vector.load %arg3[%c0_3, %c0_4] : memref<48x32xf32, #tpu.memory_space<vmem>>, vector<48x32xf32>
    %cst = arith.constant dense<0.000000e+00> : vector<48x128xf32>
    %11 = tpu.matmul %10, %9, %cst {dimension_numbers = #tpu.dot_dimension_numbers<[1], [0], [0], [1], [0, 0, 1, 1], [], []>} : vector<48x32xf32>, vector<32x128xf32>, vector<48x128xf32> -> vector<48x128xf32>
    %12 = vector.extract_strided_slice %11 {offsets = [0, 0], sizes = [24, 128], strides = [1, 1]} : vector<48x128xf32> to vector<24x128xf32>
    %13 = vector.extract_strided_slice %11 {offsets = [24, 0], sizes = [24, 128], strides = [1, 1]} : vector<48x128xf32> to vector<24x128xf32>
    %14 = arith.mulf %12, %12 : vector<24x128xf32>
    %15 = arith.mulf %13, %13 : vector<24x128xf32>
    %16 = arith.addf %14, %15 : vector<24x128xf32>
    %17 = math.sqrt %16 : vector<24x128xf32>
    %c0_5 = arith.constant 0 : index
    %c0_6 = arith.constant 0 : index
    %18 = vector.load %arg4[%c0_5, %c0_6] : memref<8x24xf32, #tpu.memory_space<vmem>>, vector<8x24xf32>
    %cst_7 = arith.constant dense<0.000000e+00> : vector<8x128xf32>
    %19 = tpu.matmul %18, %17, %cst_7 {dimension_numbers = #tpu.dot_dimension_numbers<[1], [0], [0], [1], [0, 0, 1, 1], [], []>} : vector<8x24xf32>, vector<24x128xf32>, vector<8x128xf32> -> vector<8x128xf32>
    %cst_8 = arith.constant 9.99999974E-6 : f32
    %20 = vector.broadcast %cst_8 : f32 to vector<8x128xf32>
    %21 = arith.maximumf %19, %20 : vector<8x128xf32>
    %22 = math.log %21 : vector<8x128xf32>
    %c0_9 = arith.constant 0 : index
    %c0_10 = arith.constant 0 : index
    %23 = vector.load %arg5[%c0_9, %c0_10] : memref<16x8xf32, #tpu.memory_space<vmem>>, vector<16x8xf32>
    %cst_11 = arith.constant dense<0.000000e+00> : vector<16x128xf32>
    %24 = tpu.matmul %23, %22, %cst_11 {dimension_numbers = #tpu.dot_dimension_numbers<[1], [0], [0], [1], [0, 0, 1, 1], [], []>} : vector<16x8xf32>, vector<8x128xf32>, vector<16x128xf32> -> vector<16x128xf32>
    %c0_12 = arith.constant 0 : index
    %c0_13 = arith.constant 0 : index
    %25 = vector.load %arg6[%c0_12, %c0_13] : memref<16x1xf32, #tpu.memory_space<vmem>>, vector<16x1xf32>
    %26 = vector.broadcast %25 : vector<16x1xf32> to vector<16x128xf32>
    %27 = arith.addf %24, %26 : vector<16x128xf32>
    %cst_14 = arith.constant 0.000000e+00 : f32
    %28 = vector.broadcast %cst_14 : f32 to vector<16x128xf32>
    %29 = arith.maximumf %27, %28 : vector<16x128xf32>
    %c0_15 = arith.constant 0 : index
    %c0_16 = arith.constant 0 : index
    %30 = vector.load %arg7[%c0_15, %c0_16] : memref<8x16xf32, #tpu.memory_space<vmem>>, vector<8x16xf32>
    %cst_17 = arith.constant dense<0.000000e+00> : vector<8x128xf32>
    %31 = tpu.matmul %30, %29, %cst_17 {dimension_numbers = #tpu.dot_dimension_numbers<[1], [0], [0], [1], [0, 0, 1, 1], [], []>} : vector<8x16xf32>, vector<16x128xf32>, vector<8x128xf32> -> vector<8x128xf32>
    %c0_18 = arith.constant 0 : index
    %c0_19 = arith.constant 0 : index
    %32 = vector.load %arg8[%c0_18, %c0_19] : memref<8x1xf32, #tpu.memory_space<vmem>>, vector<8x1xf32>
    %33 = vector.broadcast %32 : vector<8x1xf32> to vector<8x128xf32>
    %34 = arith.addf %31, %33 : vector<8x128xf32>
    %35 = math.tanh %34 : vector<8x128xf32>
    %c0_20 = arith.constant 0 : index
    %c0_21 = arith.constant 0 : index
    %36 = vector.load %arg9[%c0_20, %c0_21] : memref<8x128xf32, #tpu.memory_space<vmem>>, vector<8x128xf32>
    tpu.vector_store %arg9[%c0_20, %c0_21], %35 {strides = array<i32>} : memref<8x128xf32, #tpu.memory_space<vmem>>, vector<8x128xf32>,
    return
  }
  func.func @transform_0(%arg0: i32) -> (i32, i32) {
    %c0_i32 = arith.constant 0 : i32
    %c0_i32_0 = arith.constant 0 : i32
    return %c0_i32, %arg0 : i32, i32
  }
  func.func @transform_1(%arg0: i32) -> (i32, i32) {
    %c1_i32 = arith.constant 1 : i32
    %0 = arith.addi %arg0, %c1_i32 : i32
    %c0_i32 = arith.constant 0 : i32
    %c0_i32_0 = arith.constant 0 : i32
    return %c0_i32, %0 : i32, i32
  }
  func.func @transform_2(%arg0: i32) -> (i32, i32) {
    %c0_i32 = arith.constant 0 : i32
    %c0_i32_0 = arith.constant 0 : i32
    %c0_i32_1 = arith.constant 0 : i32
    return %c0_i32, %c0_i32_0 : i32, i32
  }
  func.func @transform_3(%arg0: i32) -> (i32, i32) {
    %c0_i32 = arith.constant 0 : i32
    %c0_i32_0 = arith.constant 0 : i32
    %c0_i32_1 = arith.constant 0 : i32
    return %c0_i32, %c0_i32_0 : i32, i32
  }
  func.func @transform_4(%arg0: i32) -> (i32, i32) {
    %c0_i32 = arith.constant 0 : i32
    %c0_i32_0 = arith.constant 0 : i32
    %c0_i32_1 = arith.constant 0 : i32
    return %c0_i32, %c0_i32_0 : i32, i32
  }
  func.func @transform_5(%arg0: i32) -> (i32, i32) {
    %c0_i32 = arith.constant 0 : i32
    %c0_i32_0 = arith.constant 0 : i32
    %c0_i32_1 = arith.constant 0 : i32
    return %c0_i32, %c0_i32_0 : i32, i32
  }
  func.func @transform_6(%arg0: i32) -> (i32, i32) {
    %c0_i32 = arith.constant 0 : i32
    %c0_i32_0 = arith.constant 0 : i32
    %c0_i32_1 = arith.constant 0 : i32
    return %c0_i32, %c0_i32_0 : i32, i32
  }
  func.func @transform_7(%arg0: i32) -> (i32, i32) {
    %c0_i32 = arith.constant 0 : i32
    %c0_i32_0 = arith.constant 0 : i32
    %c0_i32_1 = arith.constant 0 : i32
    return %c0_i32, %c0_i32_0 : i32, i32
  }
  func.func @transform_8(%arg0: i32) -> (i32, i32) {
    %c0_i32 = arith.constant 0 : i32
    %c0_i32_0 = arith.constant 0 : i32
    return %c0_i32, %arg0 : i32, i32
  }
}

module attributes {stable_mosaic.version = 11 : i64} {
  func.func @kernel(%arg0: i32, %arg1: memref<16x128xf32, #tpu.memory_space<vmem>>, %arg2: memref<16x128xf32, #tpu.memory_space<vmem>>, %arg3: memref<16x128xf32, #tpu.memory_space<vmem>>, %arg4: memref<16x128xf32, #tpu.memory_space<vmem>>, %arg5: memref<80x1xf32, #tpu.memory_space<vmem>>, %arg6: memref<80x64xf32, #tpu.memory_space<vmem>>, %arg7: memref<64x80xf32, #tpu.memory_space<vmem>>, %arg8: memref<16x128xf32, #tpu.memory_space<vmem>>, %arg9: memref<16x128xf32, #tpu.memory_space<vmem>>) attributes {dimension_semantics = [#tpu.dimension_semantics<parallel>], iteration_bounds = array<i64: 1>, scalar_prefetch = 0 : i64, scratch_operands = 0 : i64, tpu.core_type = #tpu.core_type<tc>, window_params = [{transform_indices = @transform_0, window_bounds = array<i64: 16, 128>}, {transform_indices = @transform_1, window_bounds = array<i64: 16, 128>}, {transform_indices = @transform_2, window_bounds = array<i64: 16, 128>}, {transform_indices = @transform_3, window_bounds = array<i64: 16, 128>}, {pipeline_mode = #tpu.pipeline_mode<synchronous>, transform_indices = @transform_4, window_bounds = array<i64: 80, 1>}, {pipeline_mode = #tpu.pipeline_mode<synchronous>, transform_indices = @transform_5, window_bounds = array<i64: 80, 64>}, {pipeline_mode = #tpu.pipeline_mode<synchronous>, transform_indices = @transform_6, window_bounds = array<i64: 64, 80>}, {transform_indices = @transform_7, window_bounds = array<i64: 16, 128>}, {transform_indices = @transform_8, window_bounds = array<i64: 16, 128>}]} {
    %c0 = arith.constant 0 : index
    %c0_0 = arith.constant 0 : index
    %0 = vector.load %arg1[%c0, %c0_0] : memref<16x128xf32, #tpu.memory_space<vmem>>, vector<16x128xf32>
    %c0_1 = arith.constant 0 : index
    %c0_2 = arith.constant 0 : index
    %1 = vector.load %arg2[%c0_1, %c0_2] : memref<16x128xf32, #tpu.memory_space<vmem>>, vector<16x128xf32>
    %2 = tpu.concatenate %0, %1 in 1 : vector<16x128xf32>, vector<16x128xf32> -> vector<16x256xf32>
    %c255_i32 = arith.constant 255 : i32
    %3 = tpu.dynamic_rotate %2 by %c255_i32 dim 1 : vector<16x256xf32>, i32 -> vector<16x256xf32>
    %4 = vector.extract_strided_slice %3 {offsets = [0, 0], sizes = [16, 128], strides = [1, 1]} : vector<16x256xf32> to vector<16x128xf32>
    %c254_i32 = arith.constant 254 : i32
    %5 = tpu.dynamic_rotate %2 by %c254_i32 dim 1 : vector<16x256xf32>, i32 -> vector<16x256xf32>
    %6 = vector.extract_strided_slice %5 {offsets = [0, 0], sizes = [16, 128], strides = [1, 1]} : vector<16x256xf32> to vector<16x128xf32>
    %c253_i32 = arith.constant 253 : i32
    %7 = tpu.dynamic_rotate %2 by %c253_i32 dim 1 : vector<16x256xf32>, i32 -> vector<16x256xf32>
    %8 = vector.extract_strided_slice %7 {offsets = [0, 0], sizes = [16, 128], strides = [1, 1]} : vector<16x256xf32> to vector<16x128xf32>
    %9 = tpu.concatenate %0, %4, %6, %8 in 0 : vector<16x128xf32>, vector<16x128xf32>, vector<16x128xf32>, vector<16x128xf32> -> vector<64x128xf32>
    %c0_3 = arith.constant 0 : index
    %c0_4 = arith.constant 0 : index
    %10 = vector.load %arg3[%c0_3, %c0_4] : memref<16x128xf32, #tpu.memory_space<vmem>>, vector<16x128xf32>
    %c0_5 = arith.constant 0 : index
    %c0_6 = arith.constant 0 : index
    %11 = vector.load %arg4[%c0_5, %c0_6] : memref<16x128xf32, #tpu.memory_space<vmem>>, vector<16x128xf32>
    %12 = tpu.concatenate %10, %11 in 1 : vector<16x128xf32>, vector<16x128xf32> -> vector<16x256xf32>
    %c255_i32_7 = arith.constant 255 : i32
    %13 = tpu.dynamic_rotate %12 by %c255_i32_7 dim 1 : vector<16x256xf32>, i32 -> vector<16x256xf32>
    %14 = vector.extract_strided_slice %13 {offsets = [0, 0], sizes = [16, 128], strides = [1, 1]} : vector<16x256xf32> to vector<16x128xf32>
    %c254_i32_8 = arith.constant 254 : i32
    %15 = tpu.dynamic_rotate %12 by %c254_i32_8 dim 1 : vector<16x256xf32>, i32 -> vector<16x256xf32>
    %16 = vector.extract_strided_slice %15 {offsets = [0, 0], sizes = [16, 128], strides = [1, 1]} : vector<16x256xf32> to vector<16x128xf32>
    %c253_i32_9 = arith.constant 253 : i32
    %17 = tpu.dynamic_rotate %12 by %c253_i32_9 dim 1 : vector<16x256xf32>, i32 -> vector<16x256xf32>
    %18 = vector.extract_strided_slice %17 {offsets = [0, 0], sizes = [16, 128], strides = [1, 1]} : vector<16x256xf32> to vector<16x128xf32>
    %19 = tpu.concatenate %10, %14, %16, %18 in 0 : vector<16x128xf32>, vector<16x128xf32>, vector<16x128xf32>, vector<16x128xf32> -> vector<64x128xf32>
    %20 = tpu.concatenate %9, %19 in 1 : vector<64x128xf32>, vector<64x128xf32> -> vector<64x256xf32>
    %c0_10 = arith.constant 0 : index
    %c0_11 = arith.constant 0 : index
    %21 = vector.load %arg6[%c0_10, %c0_11] : memref<80x64xf32, #tpu.memory_space<vmem>>, vector<80x64xf32>
    %cst = arith.constant dense<0.000000e+00> : vector<80x256xf32>
    %22 = tpu.matmul %21, %20, %cst {dimension_numbers = #tpu.dot_dimension_numbers<[1], [0], [0], [1], [0, 0, 1, 1], [], []>} : vector<80x64xf32>, vector<64x256xf32>, vector<80x256xf32> -> vector<80x256xf32>
    %c0_12 = arith.constant 0 : index
    %c0_13 = arith.constant 0 : index
    %23 = vector.load %arg5[%c0_12, %c0_13] : memref<80x1xf32, #tpu.memory_space<vmem>>, vector<80x1xf32>
    %24 = vector.extract_strided_slice %22 {offsets = [0, 0], sizes = [80, 128], strides = [1, 1]} : vector<80x256xf32> to vector<80x128xf32>
    %25 = vector.broadcast %23 : vector<80x1xf32> to vector<80x128xf32>
    %26 = arith.mulf %24, %25 : vector<80x128xf32>
    %27 = vector.extract_strided_slice %22 {offsets = [0, 128], sizes = [80, 128], strides = [1, 1]} : vector<80x256xf32> to vector<80x128xf32>
    %cst_14 = arith.constant 1.000000e+00 : f32
    %28 = vector.broadcast %cst_14 : f32 to vector<80x1xf32>
    %29 = arith.subf %28, %23 : vector<80x1xf32>
    %30 = vector.broadcast %29 : vector<80x1xf32> to vector<80x128xf32>
    %31 = arith.mulf %27, %30 : vector<80x128xf32>
    %32 = arith.addf %26, %31 : vector<80x128xf32>
    %c0_15 = arith.constant 0 : index
    %c0_16 = arith.constant 0 : index
    %33 = vector.load %arg7[%c0_15, %c0_16] : memref<64x80xf32, #tpu.memory_space<vmem>>, vector<64x80xf32>
    %cst_17 = arith.constant dense<0.000000e+00> : vector<64x128xf32>
    %34 = tpu.matmul %33, %32, %cst_17 {dimension_numbers = #tpu.dot_dimension_numbers<[1], [0], [0], [1], [0, 0, 1, 1], [], []>} : vector<64x80xf32>, vector<80x128xf32>, vector<64x128xf32> -> vector<64x128xf32>
    %35 = tpu.iota {dimensions = array<i32: 1>} : vector<16x128xi32>
    %c128_i32 = arith.constant 128 : i32
    %36 = arith.muli %arg0, %c128_i32 : i32
    %37 = vector.broadcast %36 : i32 to vector<16x128xi32>
    %38 = arith.addi %35, %37 : vector<16x128xi32>
    %c31_i32 = arith.constant 31 : i32
    %39 = vector.broadcast %c31_i32 : i32 to vector<16x128xi32>
    %40 = arith.cmpi slt, %38, %39 : vector<16x128xi32>
    %41 = arith.extui %40 : vector<16x128xi1> to vector<16x128xi32>
    %42 = arith.sitofp %41 : vector<16x128xi32> to vector<16x128xf32>
    %43 = vector.extract_strided_slice %34 {offsets = [0, 0], sizes = [16, 128], strides = [1, 1]} : vector<64x128xf32> to vector<16x128xf32>
    %44 = arith.mulf %43, %42 : vector<16x128xf32>
    %cst_18 = arith.constant 0.000000e+00 : f32
    %45 = vector.broadcast %cst_18 : f32 to vector<16x128xf32>
    %46 = vector.extract_strided_slice %34 {offsets = [16, 0], sizes = [16, 128], strides = [1, 1]} : vector<64x128xf32> to vector<16x128xf32>
    %47 = arith.mulf %46, %42 : vector<16x128xf32>
    %c1_i32 = arith.constant 1 : i32
    %48 = tpu.dynamic_rotate %47 by %c1_i32 dim 1 : vector<16x128xf32>, i32 -> vector<16x128xf32>
    %c1_i32_19 = arith.constant 1 : i32
    %49 = vector.broadcast %c1_i32_19 : i32 to vector<16x128xi32>
    %50 = arith.cmpi sge, %35, %49 : vector<16x128xi32>
    %cst_20 = arith.constant 0.000000e+00 : f32
    %51 = vector.broadcast %cst_20 : f32 to vector<16x128xf32>
    %52 = arith.select %50, %48, %51 : vector<16x128xi1>, vector<16x128xf32>
    %53 = arith.addf %44, %52 : vector<16x128xf32>
    %c1_i32_21 = arith.constant 1 : i32
    %54 = vector.broadcast %c1_i32_21 : i32 to vector<16x128xi32>
    %55 = arith.cmpi slt, %35, %54 : vector<16x128xi32>
    %cst_22 = arith.constant 0.000000e+00 : f32
    %56 = vector.broadcast %cst_22 : f32 to vector<16x128xf32>
    %57 = arith.select %55, %48, %56 : vector<16x128xi1>, vector<16x128xf32>
    %58 = arith.addf %45, %57 : vector<16x128xf32>
    %59 = vector.extract_strided_slice %34 {offsets = [32, 0], sizes = [16, 128], strides = [1, 1]} : vector<64x128xf32> to vector<16x128xf32>
    %60 = arith.mulf %59, %42 : vector<16x128xf32>
    %c2_i32 = arith.constant 2 : i32
    %61 = tpu.dynamic_rotate %60 by %c2_i32 dim 1 : vector<16x128xf32>, i32 -> vector<16x128xf32>
    %c2_i32_23 = arith.constant 2 : i32
    %62 = vector.broadcast %c2_i32_23 : i32 to vector<16x128xi32>
    %63 = arith.cmpi sge, %35, %62 : vector<16x128xi32>
    %cst_24 = arith.constant 0.000000e+00 : f32
    %64 = vector.broadcast %cst_24 : f32 to vector<16x128xf32>
    %65 = arith.select %63, %61, %64 : vector<16x128xi1>, vector<16x128xf32>
    %66 = arith.addf %53, %65 : vector<16x128xf32>
    %c2_i32_25 = arith.constant 2 : i32
    %67 = vector.broadcast %c2_i32_25 : i32 to vector<16x128xi32>
    %68 = arith.cmpi slt, %35, %67 : vector<16x128xi32>
    %cst_26 = arith.constant 0.000000e+00 : f32
    %69 = vector.broadcast %cst_26 : f32 to vector<16x128xf32>
    %70 = arith.select %68, %61, %69 : vector<16x128xi1>, vector<16x128xf32>
    %71 = arith.addf %58, %70 : vector<16x128xf32>
    %72 = vector.extract_strided_slice %34 {offsets = [48, 0], sizes = [16, 128], strides = [1, 1]} : vector<64x128xf32> to vector<16x128xf32>
    %73 = arith.mulf %72, %42 : vector<16x128xf32>
    %c3_i32 = arith.constant 3 : i32
    %74 = tpu.dynamic_rotate %73 by %c3_i32 dim 1 : vector<16x128xf32>, i32 -> vector<16x128xf32>
    %c3_i32_27 = arith.constant 3 : i32
    %75 = vector.broadcast %c3_i32_27 : i32 to vector<16x128xi32>
    %76 = arith.cmpi sge, %35, %75 : vector<16x128xi32>
    %cst_28 = arith.constant 0.000000e+00 : f32
    %77 = vector.broadcast %cst_28 : f32 to vector<16x128xf32>
    %78 = arith.select %76, %74, %77 : vector<16x128xi1>, vector<16x128xf32>
    %79 = arith.addf %66, %78 : vector<16x128xf32>
    %c3_i32_29 = arith.constant 3 : i32
    %80 = vector.broadcast %c3_i32_29 : i32 to vector<16x128xi32>
    %81 = arith.cmpi slt, %35, %80 : vector<16x128xi32>
    %cst_30 = arith.constant 0.000000e+00 : f32
    %82 = vector.broadcast %cst_30 : f32 to vector<16x128xf32>
    %83 = arith.select %81, %74, %82 : vector<16x128xi1>, vector<16x128xf32>
    %84 = arith.addf %71, %83 : vector<16x128xf32>
    %c0_31 = arith.constant 0 : index
    %c0_32 = arith.constant 0 : index
    %85 = vector.load %arg8[%c0_31, %c0_32] : memref<16x128xf32, #tpu.memory_space<vmem>>, vector<16x128xf32>
    tpu.vector_store %arg8[%c0_31, %c0_32], %79 {strides = array<i32>} : memref<16x128xf32, #tpu.memory_space<vmem>>, vector<16x128xf32>,
    %c0_33 = arith.constant 0 : index
    %c0_34 = arith.constant 0 : index
    %86 = vector.load %arg9[%c0_33, %c0_34] : memref<16x128xf32, #tpu.memory_space<vmem>>, vector<16x128xf32>
    tpu.vector_store %arg9[%c0_33, %c0_34], %84 {strides = array<i32>} : memref<16x128xf32, #tpu.memory_space<vmem>>, vector<16x128xf32>,
    return
  }
  func.func @transform_0(%arg0: i32) -> (i32, i32) {
    %c0_i32 = arith.constant 0 : i32
    %c0_i32_0 = arith.constant 0 : i32
    return %c0_i32, %arg0 : i32, i32
  }
  func.func @transform_1(%arg0: i32) -> (i32, i32) {
    %c1_i32 = arith.constant 1 : i32
    %0 = arith.addi %arg0, %c1_i32 : i32
    %c0_i32 = arith.constant 0 : i32
    %c0_i32_0 = arith.constant 0 : i32
    return %c0_i32, %0 : i32, i32
  }
  func.func @transform_2(%arg0: i32) -> (i32, i32) {
    %c0_i32 = arith.constant 0 : i32
    %c0_i32_0 = arith.constant 0 : i32
    return %c0_i32, %arg0 : i32, i32
  }
  func.func @transform_3(%arg0: i32) -> (i32, i32) {
    %c1_i32 = arith.constant 1 : i32
    %0 = arith.addi %arg0, %c1_i32 : i32
    %c0_i32 = arith.constant 0 : i32
    %c0_i32_0 = arith.constant 0 : i32
    return %c0_i32, %0 : i32, i32
  }
  func.func @transform_4(%arg0: i32) -> (i32, i32) {
    %c0_i32 = arith.constant 0 : i32
    %c0_i32_0 = arith.constant 0 : i32
    %c0_i32_1 = arith.constant 0 : i32
    return %c0_i32, %c0_i32_0 : i32, i32
  }
  func.func @transform_5(%arg0: i32) -> (i32, i32) {
    %c0_i32 = arith.constant 0 : i32
    %c0_i32_0 = arith.constant 0 : i32
    %c0_i32_1 = arith.constant 0 : i32
    return %c0_i32, %c0_i32_0 : i32, i32
  }
  func.func @transform_6(%arg0: i32) -> (i32, i32) {
    %c0_i32 = arith.constant 0 : i32
    %c0_i32_0 = arith.constant 0 : i32
    %c0_i32_1 = arith.constant 0 : i32
    return %c0_i32, %c0_i32_0 : i32, i32
  }
  func.func @transform_7(%arg0: i32) -> (i32, i32) {
    %c0_i32 = arith.constant 0 : i32
    %c0_i32_0 = arith.constant 0 : i32
    return %c0_i32, %arg0 : i32, i32
  }
  func.func @transform_8(%arg0: i32) -> (i32, i32) {
    %c0_i32 = arith.constant 0 : i32
    %c0_i32_0 = arith.constant 0 : i32
    return %c0_i32, %arg0 : i32, i32
  }
}

module attributes {stable_mosaic.version = 11 : i64} {
  func.func @kernel(%arg0: i32, %arg1: memref<16x128xf32, #tpu.memory_space<vmem>>, %arg2: memref<16x128xf32, #tpu.memory_space<vmem>>, %arg3: memref<16x128xf32, #tpu.memory_space<vmem>>, %arg4: memref<16x128xi16, #tpu.memory_space<vmem>>) attributes {dimension_semantics = [#tpu.dimension_semantics<parallel>], iteration_bounds = array<i64: 1>, scalar_prefetch = 0 : i64, scratch_operands = 0 : i64, tpu.core_type = #tpu.core_type<tc>, window_params = [{transform_indices = @transform_0, window_bounds = array<i64: 16, 128>}, {transform_indices = @transform_1, window_bounds = array<i64: 16, 128>}, {transform_indices = @transform_2, window_bounds = array<i64: 16, 128>}, {transform_indices = @transform_3, window_bounds = array<i64: 16, 128>}]} {
    %0 = tpu.iota {dimensions = array<i32: 0>} : vector<16x128xi32>
    %1 = tpu.iota {dimensions = array<i32: 1>} : vector<16x128xi32>
    %c128_i32 = arith.constant 128 : i32
    %2 = arith.muli %arg0, %c128_i32 : i32
    %3 = vector.broadcast %2 : i32 to vector<16x128xi32>
    %4 = arith.addi %1, %3 : vector<16x128xi32>
    %c16_i32 = arith.constant 16 : i32
    %5 = vector.broadcast %c16_i32 : i32 to vector<16x128xi32>
    %6 = arith.muli %4, %5 : vector<16x128xi32>
    %7 = arith.addi %6, %0 : vector<16x128xi32>
    %c32_i32 = arith.constant 32 : i32
    %8 = vector.broadcast %c32_i32 : i32 to vector<16x128xi32>
    %9 = arith.subi %7, %8 : vector<16x128xi32>
    %10 = arith.sitofp %9 : vector<16x128xi32> to vector<16x128xf32>
    %cst = arith.constant 0.0212765951 : f32
    %11 = vector.broadcast %cst : f32 to vector<16x128xf32>
    %12 = arith.mulf %10, %11 : vector<16x128xf32>
    %cst_0 = arith.constant 0.000000e+00 : f32
    %cst_1 = arith.constant 1.000000e+00 : f32
    %13 = vector.broadcast %cst_0 : f32 to vector<16x128xf32>
    %14 = arith.maximumf %13, %12 : vector<16x128xf32>
    %15 = vector.broadcast %cst_1 : f32 to vector<16x128xf32>
    %16 = arith.minimumf %15, %14 : vector<16x128xf32>
    %c0 = arith.constant 0 : index
    %c0_2 = arith.constant 0 : index
    %17 = vector.load %arg1[%c0, %c0_2] : memref<16x128xf32, #tpu.memory_space<vmem>>, vector<16x128xf32>
    %cst_3 = arith.constant 1.000000e+00 : f32
    %18 = vector.broadcast %cst_3 : f32 to vector<16x128xf32>
    %19 = arith.subf %18, %16 : vector<16x128xf32>
    %20 = arith.mulf %17, %19 : vector<16x128xf32>
    %c0_4 = arith.constant 0 : index
    %c0_5 = arith.constant 0 : index
    %21 = vector.load %arg2[%c0_4, %c0_5] : memref<16x128xf32, #tpu.memory_space<vmem>>, vector<16x128xf32>
    %c0_6 = arith.constant 0 : index
    %c0_7 = arith.constant 0 : index
    %22 = vector.load %arg3[%c0_6, %c0_7] : memref<16x128xf32, #tpu.memory_space<vmem>>, vector<16x128xf32>
    %23 = arith.mulf %21, %22 : vector<16x128xf32>
    %24 = arith.mulf %23, %16 : vector<16x128xf32>
    %25 = arith.addf %20, %24 : vector<16x128xf32>
    %cst_8 = arith.constant -1.000000e+00 : f32
    %cst_9 = arith.constant 1.000000e+00 : f32
    %26 = vector.broadcast %cst_8 : f32 to vector<16x128xf32>
    %27 = arith.maximumf %26, %25 : vector<16x128xf32>
    %28 = vector.broadcast %cst_9 : f32 to vector<16x128xf32>
    %29 = arith.minimumf %28, %27 : vector<16x128xf32>
    %cst_10 = arith.constant 3.276700e+04 : f32
    %30 = vector.broadcast %cst_10 : f32 to vector<16x128xf32>
    %31 = arith.mulf %29, %30 : vector<16x128xf32>
    %32 = arith.fptosi %31 : vector<16x128xf32> to vector<16x128xi16>
    %c0_11 = arith.constant 0 : index
    %c0_12 = arith.constant 0 : index
    %33 = vector.load %arg4[%c0_11, %c0_12] : memref<16x128xi16, #tpu.memory_space<vmem>>, vector<16x128xi16>
    tpu.vector_store %arg4[%c0_11, %c0_12], %32 {strides = array<i32>} : memref<16x128xi16, #tpu.memory_space<vmem>>, vector<16x128xi16>,
    return
  }
  func.func @transform_0(%arg0: i32) -> (i32, i32) {
    %c0_i32 = arith.constant 0 : i32
    %c0_i32_0 = arith.constant 0 : i32
    return %c0_i32, %arg0 : i32, i32
  }
  func.func @transform_1(%arg0: i32) -> (i32, i32) {
    %c0_i32 = arith.constant 0 : i32
    %c0_i32_0 = arith.constant 0 : i32
    return %c0_i32, %arg0 : i32, i32
  }
  func.func @transform_2(%arg0: i32) -> (i32, i32) {
    %c0_i32 = arith.constant 0 : i32
    %c0_i32_0 = arith.constant 0 : i32
    return %c0_i32, %arg0 : i32, i32
  }
  func.func @transform_3(%arg0: i32) -> (i32, i32) {
    %c0_i32 = arith.constant 0 : i32
    %c0_i32_0 = arith.constant 0 : i32
    return %c0_i32, %arg0 : i32, i32
  }
}

</mosaic_0001>

<llo_original>
// kernel: _lambda_.4
$region0: #{_lambda_.4}
  #allocation0 [shape = 'u32[]', space=smem, size = 0x4, offset = 0x4, fixed_abs, tag = 'smem constant byte address 0x4 - core index']
  #allocation1 [shape = 'u32[144,128]{1,0:T(1,128)}', space=vmem, size = 0x12000, scoped, tag = 'internal scratch']
  %s0 = inlined_call_operand.vmem [shape: f32[8,256], index: 0, kind: input, shape index: {}, may-alias: {0,1}]
  %s1 = inlined_call_operand.vmem [shape: f32[8,256], index: 1, kind: input, shape index: {}, may-alias: {0,1}]
  %s2 = inlined_call_operand.vmem [shape: f32[48,32], index: 2, kind: input, shape index: {}]
  %s3 = inlined_call_operand.vmem [shape: f32[8,24], index: 3, kind: input, shape index: {}]
  %s4 = inlined_call_operand.vmem [shape: f32[16,8], index: 4, kind: input, shape index: {}]
  %s5 = inlined_call_operand.vmem [shape: f32[16,1], index: 5, kind: input, shape index: {}]
  %s6 = inlined_call_operand.vmem [shape: f32[8,16], index: 6, kind: input, shape index: {}]
  %s7 = inlined_call_operand.vmem [shape: f32[8,1], index: 7, kind: input, shape index: {}]
  %s8 = inlined_call_operand.vmem [shape: f32[8,128], index: 8, kind: output, shape index: {}]
  %s9 = sld [smem:[#allocation0]]
  $region42: #{_lambda_.4} parent=0
    _
  %s11 = ssub.s32 1, %s9
  %s12 = scalar_select 0, %s11, %s9
  // Predicated region
  $region2: #{_lambda_.4} parent=0 // pred_check
    _
  $region3: #{_lambda_.4} parent=0 // pred_check_branch
    %14 = sbr.rel (0) target = $region5
  $region4: #{_lambda_.4} parent=0 // pred_region
    _
  $region5: #{_lambda_.4} parent=0 // pred_fallthru
    _
  // Predicated region
  $region6: #{_lambda_.4} parent=0 // pred_check
    _
  $region7: #{_lambda_.4} parent=0 // pred_check_branch
    %16 = sbr.rel (0) target = $region9
  $region8: #{_lambda_.4} parent=0 // pred_region
    %s17 = sadd.s32 0, 1
    %p18 = scmp.lt.s32.totalorder %s17, 1
    %s19 = scalar_select %p18, %s17, 1
    %s20 = smul.addr %s19, 8
    %s21 = scalar_lea.vmem %s1, %s20
    %s22 = sadd.s32 0, 1
  $region9: #{_lambda_.4} parent=0 // pred_fallthru
    _
  // Predicated region
  $region10: #{_lambda_.4} parent=0 // pred_check
    _
  $region11: #{_lambda_.4} parent=0 // pred_check_branch
    %24 = sbr.rel (0) target = $region13
  $region12: #{_lambda_.4} parent=0 // pred_region
    _
  $region13: #{_lambda_.4} parent=0 // pred_fallthru
    _
  // Predicated region
  $region14: #{_lambda_.4} parent=0 // pred_check
    _
  $region15: #{_lambda_.4} parent=0 // pred_check_branch
    %26 = sbr.rel (0) target = $region17
  $region16: #{_lambda_.4} parent=0 // pred_region
    _
  $region17: #{_lambda_.4} parent=0 // pred_fallthru
    _
  // Predicated region
  $region18: #{_lambda_.4} parent=0 // pred_check
    _
  $region19: #{_lambda_.4} parent=0 // pred_check_branch
    %28 = sbr.rel (0) target = $region21
  $region20: #{_lambda_.4} parent=0 // pred_region
    _
  $region21: #{_lambda_.4} parent=0 // pred_fallthru
    _
  // Predicated region
  $region22: #{_lambda_.4} parent=0 // pred_check
    _
  $region23: #{_lambda_.4} parent=0 // pred_check_branch
    %30 = sbr.rel (0) target = $region25
  $region24: #{_lambda_.4} parent=0 // pred_region
    _
  $region25: #{_lambda_.4} parent=0 // pred_fallthru
    _
  // Predicated region
  $region26: #{_lambda_.4} parent=0 // pred_check
    _
  $region27: #{_lambda_.4} parent=0 // pred_check_branch
    %32 = sbr.rel (0) target = $region29
  $region28: #{_lambda_.4} parent=0 // pred_region
    _
  $region29: #{_lambda_.4} parent=0 // pred_fallthru
    _
  // Predicated region
  $region30: #{_lambda_.4} parent=0 // pred_check
    _
  $region31: #{_lambda_.4} parent=0 // pred_check_branch
    %34 = sbr.rel (0) target = $region33
  $region32: #{_lambda_.4} parent=0 // pred_region
    _
  $region33: #{_lambda_.4} parent=0 // pred_fallthru
    _
  %s35 = sadd.s32 0, 1
  %p36 = scmp.lt.s32.totalorder %s35, 1
  %s37 = scalar_select %p36, %s35, 1
  %s38 = smul.addr %s37, 8
  %s39 = scalar_lea.vmem %s1, %s38
  %s40 = sadd.s32 0, 1
  %p41 = scmp.lt.s32.totalorder %s40, 1
  %s42 = scalar_select %p41, %s40, 1
  %s43 = smul.addr %s42, 8
  %s44 = scalar_lea.vmem %s1, %s43
  %s45 = sadd.s32 0, 1
  %v46 = vld [vmem:[%s0] sm:$0xff]
  %v47 = vld [vmem:[%s44] sm:$0xff]
  %48 = vrot.lane.b32.xlu0 %v46, 127
  %v49 = vpop.permute.xlu0 %48
  %50 = vrot.lane.b32.xlu0 %v47, 127
  %v51 = vpop.permute.xlu0 %50
  %v52 = vlaneseq
  %v53 = vand.u32 %v52, 127
  %vm54 = vcmp.lt.s32.totalorder %v53, 127
  %v55 = vsel %vm54, %v49, %v51
  %56 = vrot.lane.b32.xlu0 %v46, 126
  %v57 = vpop.permute.xlu0 %56
  %58 = vrot.lane.b32.xlu0 %v47, 126
  %v59 = vpop.permute.xlu0 %58
  %vm60 = vcmp.lt.s32.totalorder %v53, 126
  %v61 = vsel %vm60, %v57, %v59
  %62 = vrot.lane.b32.xlu0 %v46, 125
  %v63 = vpop.permute.xlu0 %62
  %64 = vrot.lane.b32.xlu0 %v47, 125
  %v65 = vpop.permute.xlu0 %64
  %vm66 = vcmp.lt.s32.totalorder %v53, 125
  %v67 = vsel %vm66, %v63, %v65
  %v68 = vld [vmem:[%s2] sm:$0xff]
  %v69 = vld [vmem:[%s2 + $0x8] sm:$0xff]
  %v70 = vld [vmem:[%s2 + $0x10] sm:$0xff]
  %v71 = vld [vmem:[%s2 + $0x18] sm:$0xff]
  %v72 = vld [vmem:[%s2 + $0x20] sm:$0xff]
  %v73 = vld [vmem:[%s2 + $0x28] sm:$0xff]
  %vm74 = vcmask 261120
  %v76 = vsel %vm74, %v68, 0
  %v79 = vsel %vm74, %v69, 0
  %v82 = vsel %vm74, %v70, 0
  %v85 = vsel %vm74, %v71, 0
  %v88 = vsel %vm74, %v72, 0
  %v91 = vsel %vm74, %v73, 0
  %93 = vmatprep.subr.mxu0 0.0
  %94 = vmatpush1.msra.mxu0 0.0
  %95 = vmatprep.subr.mxu0 0.0
  %96 = vmatpush1.msra.mxu0 0.0
  %97 = vmatprep.subr.mxu0 0.0
  %98 = vmatpush1.msra.mxu0 0.0
  %99 = vmatprep.subr.mxu0 0.0
  %100 = vmatpush1.msra.mxu0 0.0
  %101 = vmatprep.subr.mxu0 0.0
  %102 = vmatpush1.msra.mxu0 0.0
  %103 = vmatprep.subr.mxu0 0.0
  %104 = vmatpush1.msra.mxu0 0.0
  %105 = vmatprep.subr.mxu0 0.0
  %106 = vmatpush1.msra.mxu0 0.0
  %107 = vmatprep.subr.mxu0 0.0
  %108 = vmatpush1.msra.mxu0 0.0
  %109 = vmatprep.subr.mxu0 0.0
  %110 = vmatpush1.msra.mxu0 0.0
  %111 = vmatprep.subr.mxu0 0.0
  %112 = vmatpush1.msra.mxu0 0.0
  %113 = vmatprep.subr.mxu0 0.0
  %114 = vmatpush1.msra.mxu0 0.0
  %115 = vmatprep.subr.mxu0 0.0
  %116 = vmatpush1.msra.mxu0 0.0
  %117 = vmatprep.subr.mxu0 0.0
  %118 = vmatpush1.msra.mxu0 %v67
  %119 = vmatprep.subr.mxu0 0.0
  %120 = vmatpush1.msra.mxu0 %v61
  %121 = vmatprep.subr.mxu0 0.0
  %122 = vmatpush1.msra.mxu0 %v55
  %123 = vmatprep.subr.mxu0 0.0
  %124 = vmatpush1.msra.mxu0 %v46
  %125 = vmatprep.subr.mxu0 0.0
  %126 = vmatpush2.msra.mxu0 0.0
  %127 = vmatprep.subr.mxu0 0.0
  %128 = vmatpush2.msra.mxu0 0.0
  %129 = vmatprep.subr.mxu0 0.0
  %130 = vmatpush2.msra.mxu0 0.0
  %131 = vmatprep.subr.mxu0 0.0
  %132 = vmatpush2.msra.mxu0 0.0
  %133 = vmatprep.subr.mxu0 0.0
  %134 = vmatpush2.msra.mxu0 0.0
  %135 = vmatprep.subr.mxu0 0.0
  %136 = vmatpush2.msra.mxu0 0.0
  %137 = vmatprep.subr.mxu0 0.0
  %138 = vmatpush2.msra.mxu0 0.0
  %139 = vmatprep.subr.mxu0 0.0
  %140 = vmatpush2.msra.mxu0 0.0
  %141 = vmatprep.subr.mxu0 0.0
  %142 = vmatpush2.msra.mxu0 0.0
  %143 = vmatprep.subr.mxu0 0.0
  %144 = vmatpush2.msra.mxu0 0.0
  %145 = vmatprep.subr.mxu0 0.0
  %146 = vmatpush2.msra.mxu0 0.0
  %147 = vmatprep.subr.mxu0 0.0
  %148 = vmatpush2.msra.mxu0 0.0
  %149 = vmatprep.subr.mxu0 0.0
  %150 = vmatpush2.msra.mxu0 0.0
  %151 = vmatprep.subr.mxu0 0.0
  %152 = vmatpush2.msra.mxu0 0.0
  %153 = vmatprep.subr.mxu0 0.0
  %154 = vmatpush2.msra.mxu0 0.0
  %155 = vmatprep.subr.mxu0 0.0
  %156 = vmatpush2.msra.mxu0 0.0
  %157 = vmatprep.mubr.f32.mxu0 0.0
  %158 = vmatmul.mubr.f32.gmra.mxu0 %v76
  %v159 = vpop.f32.mrf.mxu0
  %v160 = vadd.f32 0.0, %v159
  %v161 = vpop.f32.mrf.mxu0
  %162 = vmatprep.mubr.f32.mxu0 0.0
  %163 = vmatmul.mubr.f32.gmra.mxu0 %v79
  %v164 = vpop.f32.mrf.mxu0
  %v165 = vadd.f32 0.0, %v164
  %v166 = vpop.f32.mrf.mxu0
  %167 = vmatprep.mubr.f32.mxu0 0.0
  %168 = vmatmul.mubr.f32.gmra.mxu0 %v82
  %v169 = vpop.f32.mrf.mxu0
  %v170 = vadd.f32 0.0, %v169
  %v171 = vpop.f32.mrf.mxu0
  %172 = vmatprep.mubr.f32.mxu0 0.0
  %173 = vmatmul.mubr.f32.gmra.mxu0 %v85
  %v174 = vpop.f32.mrf.mxu0
  %v175 = vadd.f32 0.0, %v174
  %v176 = vpop.f32.mrf.mxu0
  %177 = vmatprep.mubr.f32.mxu0 0.0
  %178 = vmatmul.mubr.f32.gmra.mxu0 %v88
  %v179 = vpop.f32.mrf.mxu0
  %v180 = vadd.f32 0.0, %v179
  %v181 = vpop.f32.mrf.mxu0
  %182 = vmatprep.mubr.f32.mxu0 0.0
  %183 = vmatmul.mubr.f32.gmra.mxu0 %v91
  %v184 = vpop.f32.mrf.mxu0
  %v185 = vadd.f32 0.0, %v184
  %v186 = vpop.f32.mrf.mxu0
  %187 = vdwg.mxu0
  %v188 = vmul.f32 %v160, %v160
  %v189 = vmul.f32 %v165, %v165
  %v190 = vmul.f32 %v170, %v170
  %v191 = vmul.f32 %v175, %v175
  %v192 = vmul.f32 %v180, %v180
  %v193 = vmul.f32 %v185, %v185
  %v194 = vadd.f32 %v188, %v191
  %v195 = vadd.f32 %v189, %v192
  %v196 = vadd.f32 %v190, %v193
  %v197 = vrsqrt.pop %v194
  %v198 = vmul.f32 %v194, %v197
  %vm199 = vcmp.eq.f32.partialorder %v194, inf
  %v200 = vsel %vm199, %v194, %v198
  %vm201 = vcmp.eq.f32.partialorder %v194, 0.0
  %v202 = vand.u32 %v194, 2147483648
  %v203 = vsel %vm201, %v202, %v200
  %v204 = vrsqrt.pop %v195
  %v205 = vmul.f32 %v195, %v204
  %vm206 = vcmp.eq.f32.partialorder %v195, inf
  %v207 = vsel %vm206, %v195, %v205
  %vm208 = vcmp.eq.f32.partialorder %v195, 0.0
  %v209 = vand.u32 %v195, 2147483648
  %v210 = vsel %vm208, %v209, %v207
  %v211 = vrsqrt.pop %v196
  %v212 = vmul.f32 %v196, %v211
  %vm213 = vcmp.eq.f32.partialorder %v196, inf
  %v214 = vsel %vm213, %v196, %v212
  %vm215 = vcmp.eq.f32.partialorder %v196, 0.0
  %v216 = vand.u32 %v196, 2147483648
  %v217 = vsel %vm215, %v216, %v214
  %v218 = vld [vmem:[%s3] sm:$0xff]
  %vm219 = vcmask 195584
  %v221 = vsel %vm219, %v218, 0
  %223 = vmatprep.subr.mxu0 0.0
  %224 = vmatpush1.msra.mxu0 0.0
  %225 = vmatprep.subr.mxu0 0.0
  %226 = vmatpush1.msra.mxu0 0.0
  %227 = vmatprep.subr.mxu0 0.0
  %228 = vmatpush1.msra.mxu0 0.0
  %229 = vmatprep.subr.mxu0 0.0
  %230 = vmatpush1.msra.mxu0 0.0
  %231 = vmatprep.subr.mxu0 0.0
  %232 = vmatpush1.msra.mxu0 0.0
  %233 = vmatprep.subr.mxu0 0.0
  %234 = vmatpush1.msra.mxu0 0.0
  %235 = vmatprep.subr.mxu0 0.0
  %236 = vmatpush1.msra.mxu0 0.0
  %237 = vmatprep.subr.mxu0 0.0
  %238 = vmatpush1.msra.mxu0 0.0
  %239 = vmatprep.subr.mxu0 0.0
  %240 = vmatpush1.msra.mxu0 0.0
  %241 = vmatprep.subr.mxu0 0.0
  %242 = vmatpush1.msra.mxu0 0.0
  %243 = vmatprep.subr.mxu0 0.0
  %244 = vmatpush1.msra.mxu0 0.0
  %245 = vmatprep.subr.mxu0 0.0
  %246 = vmatpush1.msra.mxu0 0.0
  %247 = vmatprep.subr.mxu0 0.0
  %248 = vmatpush1.msra.mxu0 0.0
  %249 = vmatprep.subr.mxu0 0.0
  %250 = vmatpush1.msra.mxu0 %v217
  %251 = vmatprep.subr.mxu0 0.0
  %252 = vmatpush1.msra.mxu0 %v210
  %253 = vmatprep.subr.mxu0 0.0
  %254 = vmatpush1.msra.mxu0 %v203
  %255 = vmatprep.subr.mxu0 0.0
  %256 = vmatpush2.msra.mxu0 0.0
  %257 = vmatprep.subr.mxu0 0.0
  %258 = vmatpush2.msra.mxu0 0.0
  %259 = vmatprep.subr.mxu0 0.0
  %260 = vmatpush2.msra.mxu0 0.0
  %261 = vmatprep.subr.mxu0 0.0
  %262 = vmatpush2.msra.mxu0 0.0
  %263 = vmatprep.subr.mxu0 0.0
  %264 = vmatpush2.msra.mxu0 0.0
  %265 = vmatprep.subr.mxu0 0.0
  %266 = vmatpush2.msra.mxu0 0.0
  %267 = vmatprep.subr.mxu0 0.0
  %268 = vmatpush2.msra.mxu0 0.0
  %269 = vmatprep.subr.mxu0 0.0
  %270 = vmatpush2.msra.mxu0 0.0
  %271 = vmatprep.subr.mxu0 0.0
  %272 = vmatpush2.msra.mxu0 0.0
  %273 = vmatprep.subr.mxu0 0.0
  %274 = vmatpush2.msra.mxu0 0.0
  %275 = vmatprep.subr.mxu0 0.0
  %276 = vmatpush2.msra.mxu0 0.0
  %277 = vmatprep.subr.mxu0 0.0
  %278 = vmatpush2.msra.mxu0 0.0
  %279 = vmatprep.subr.mxu0 0.0
  %280 = vmatpush2.msra.mxu0 0.0
  %281 = vmatprep.subr.mxu0 0.0
  %282 = vmatpush2.msra.mxu0 0.0
  %283 = vmatprep.subr.mxu0 0.0
  %284 = vmatpush2.msra.mxu0 0.0
  %285 = vmatprep.subr.mxu0 0.0
  %286 = vmatpush2.msra.mxu0 0.0
  %287 = vmatprep.mubr.f32.mxu0 0.0
  %288 = vmatmul.mubr.f32.gmra.mxu0 %v221
  %v289 = vpop.f32.mrf.mxu0
  %v290 = vadd.f32 0.0, %v289
  %v291 = vpop.f32.mrf.mxu0
  %292 = vdwg.mxu0
  %v293 = vmax.f32 %v290, 1e-05
  %v294 = vlog2.pop %v293
  %v295 = vmul.f32 %v294, 0.6931472
  %v296 = vld [vmem:[%s4] sm:$0xff]
  %v297 = vld [vmem:[%s4 + $0x8] sm:$0xff]
  %v298 = vld [vmem:[%s5] sm:$0xff]
  %v299 = vld [vmem:[%s5 + $0x8] sm:$0xff]
  %301 = vset.pattern.permute.xlu0 0
  %302 = vperm.xlu0 %301, %v298
  %v303 = vpop.permute.xlu0 %302
  %306 = vset.pattern.permute.xlu0 0
  %307 = vperm.xlu0 %306, %v299
  %v308 = vpop.permute.xlu0 %307
  %vm310 = vcmask 64512
  %v312 = vsel %vm310, %v296, 0
  %v315 = vsel %vm310, %v297, 0
  %317 = vmatprep.subr.mxu0 0.0
  %318 = vmatpush1.msra.mxu0 0.0
  %319 = vmatprep.subr.mxu0 0.0
  %320 = vmatpush1.msra.mxu0 0.0
  %321 = vmatprep.subr.mxu0 0.0
  %322 = vmatpush1.msra.mxu0 0.0
  %323 = vmatprep.subr.mxu0 0.0
  %324 = vmatpush1.msra.mxu0 0.0
  %325 = vmatprep.subr.mxu0 0.0
  %326 = vmatpush1.msra.mxu0 0.0
  %327 = vmatprep.subr.mxu0 0.0
  %328 = vmatpush1.msra.mxu0 0.0
  %329 = vmatprep.subr.mxu0 0.0
  %330 = vmatpush1.msra.mxu0 0.0
  %331 = vmatprep.subr.mxu0 0.0
  %332 = vmatpush1.msra.mxu0 0.0
  %333 = vmatprep.subr.mxu0 0.0
  %334 = vmatpush1.msra.mxu0 0.0
  %335 = vmatprep.subr.mxu0 0.0
  %336 = vmatpush1.msra.mxu0 0.0
  %337 = vmatprep.subr.mxu0 0.0
  %338 = vmatpush1.msra.mxu0 0.0
  %339 = vmatprep.subr.mxu0 0.0
  %340 = vmatpush1.msra.mxu0 0.0
  %341 = vmatprep.subr.mxu0 0.0
  %342 = vmatpush1.msra.mxu0 0.0
  %343 = vmatprep.subr.mxu0 0.0
  %344 = vmatpush1.msra.mxu0 0.0
  %345 = vmatprep.subr.mxu0 0.0
  %346 = vmatpush1.msra.mxu0 0.0
  %347 = vmatprep.subr.mxu0 0.0
  %348 = vmatpush1.msra.mxu0 %v295
  %349 = vmatprep.subr.mxu0 0.0
  %350 = vmatpush2.msra.mxu0 0.0
  %351 = vmatprep.subr.mxu0 0.0
  %352 = vmatpush2.msra.mxu0 0.0
  %353 = vmatprep.subr.mxu0 0.0
  %354 = vmatpush2.msra.mxu0 0.0
  %355 = vmatprep.subr.mxu0 0.0
  %356 = vmatpush2.msra.mxu0 0.0
  %357 = vmatprep.subr.mxu0 0.0
  %358 = vmatpush2.msra.mxu0 0.0
  %359 = vmatprep.subr.mxu0 0.0
  %360 = vmatpush2.msra.mxu0 0.0
  %361 = vmatprep.subr.mxu0 0.0
  %362 = vmatpush2.msra.mxu0 0.0
  %363 = vmatprep.subr.mxu0 0.0
  %364 = vmatpush2.msra.mxu0 0.0
  %365 = vmatprep.subr.mxu0 0.0
  %366 = vmatpush2.msra.mxu0 0.0
  %367 = vmatprep.subr.mxu0 0.0
  %368 = vmatpush2.msra.mxu0 0.0
  %369 = vmatprep.subr.mxu0 0.0
  %370 = vmatpush2.msra.mxu0 0.0
  %371 = vmatprep.subr.mxu0 0.0
  %372 = vmatpush2.msra.mxu0 0.0
  %373 = vmatprep.subr.mxu0 0.0
  %374 = vmatpush2.msra.mxu0 0.0
  %375 = vmatprep.subr.mxu0 0.0
  %376 = vmatpush2.msra.mxu0 0.0
  %377 = vmatprep.subr.mxu0 0.0
  %378 = vmatpush2.msra.mxu0 0.0
  %379 = vmatprep.subr.mxu0 0.0
  %380 = vmatpush2.msra.mxu0 0.0
  %381 = vmatprep.mubr.f32.mxu0 0.0
  %382 = vmatmul.mubr.f32.gmra.mxu0 %v312
  %v383 = vpop.f32.mrf.mxu0
  %v384 = vadd.f32 %v303, %v383
  %v385 = vpop.f32.mrf.mxu0
  %386 = vmatprep.mubr.f32.mxu0 0.0
  %387 = vmatmul.mubr.f32.gmra.mxu0 %v315
  %v388 = vpop.f32.mrf.mxu0
  %v389 = vadd.f32 %v308, %v388
  %v390 = vpop.f32.mrf.mxu0
  %391 = vdwg.mxu0
  %v392 = vmax.f32 %v384, 0.0
  %v393 = vmax.f32 %v389, 0.0
  %v394 = vld [vmem:[%s6] sm:$0xff]
  %v395 = vld [vmem:[%s7] sm:$0xff]
  %397 = vset.pattern.permute.xlu0 0
  %398 = vperm.xlu0 %397, %v395
  %v399 = vpop.permute.xlu0 %398
  %vm401 = vcmask 130048
  %v403 = vsel %vm401, %v394, 0
  %405 = vmatprep.subr.mxu0 0.0
  %406 = vmatpush1.msra.mxu0 0.0
  %407 = vmatprep.subr.mxu0 0.0
  %408 = vmatpush1.msra.mxu0 0.0
  %409 = vmatprep.subr.mxu0 0.0
  %410 = vmatpush1.msra.mxu0 0.0
  %411 = vmatprep.subr.mxu0 0.0
  %412 = vmatpush1.msra.mxu0 0.0
  %413 = vmatprep.subr.mxu0 0.0
  %414 = vmatpush1.msra.mxu0 0.0
  %415 = vmatprep.subr.mxu0 0.0
  %416 = vmatpush1.msra.mxu0 0.0
  %417 = vmatprep.subr.mxu0 0.0
  %418 = vmatpush1.msra.mxu0 0.0
  %419 = vmatprep.subr.mxu0 0.0
  %420 = vmatpush1.msra.mxu0 0.0
  %421 = vmatprep.subr.mxu0 0.0
  %422 = vmatpush1.msra.mxu0 0.0
  %423 = vmatprep.subr.mxu0 0.0
  %424 = vmatpush1.msra.mxu0 0.0
  %425 = vmatprep.subr.mxu0 0.0
  %426 = vmatpush1.msra.mxu0 0.0
  %427 = vmatprep.subr.mxu0 0.0
  %428 = vmatpush1.msra.mxu0 0.0
  %429 = vmatprep.subr.mxu0 0.0
  %430 = vmatpush1.msra.mxu0 0.0
  %431 = vmatprep.subr.mxu0 0.0
  %432 = vmatpush1.msra.mxu0 0.0
  %433 = vmatprep.subr.mxu0 0.0
  %434 = vmatpush1.msra.mxu0 %v393
  %435 = vmatprep.subr.mxu0 0.0
  %436 = vmatpush1.msra.mxu0 %v392
  %437 = vmatprep.subr.mxu0 0.0
  %438 = vmatpush2.msra.mxu0 0.0
  %439 = vmatprep.subr.mxu0 0.0
  %440 = vmatpush2.msra.mxu0 0.0
  %441 = vmatprep.subr.mxu0 0.0
  %442 = vmatpush2.msra.mxu0 0.0
  %443 = vmatprep.subr.mxu0 0.0
  %444 = vmatpush2.msra.mxu0 0.0
  %445 = vmatprep.subr.mxu0 0.0
  %446 = vmatpush2.msra.mxu0 0.0
  %447 = vmatprep.subr.mxu0 0.0
  %448 = vmatpush2.msra.mxu0 0.0
  %449 = vmatprep.subr.mxu0 0.0
  %450 = vmatpush2.msra.mxu0 0.0
  %451 = vmatprep.subr.mxu0 0.0
  %452 = vmatpush2.msra.mxu0 0.0
  %453 = vmatprep.subr.mxu0 0.0
  %454 = vmatpush2.msra.mxu0 0.0
  %455 = vmatprep.subr.mxu0 0.0
  %456 = vmatpush2.msra.mxu0 0.0
  %457 = vmatprep.subr.mxu0 0.0
  %458 = vmatpush2.msra.mxu0 0.0
  %459 = vmatprep.subr.mxu0 0.0
  %460 = vmatpush2.msra.mxu0 0.0
  %461 = vmatprep.subr.mxu0 0.0
  %462 = vmatpush2.msra.mxu0 0.0
  %463 = vmatprep.subr.mxu0 0.0
  %464 = vmatpush2.msra.mxu0 0.0
  %465 = vmatprep.subr.mxu0 0.0
  %466 = vmatpush2.msra.mxu0 0.0
  %467 = vmatprep.subr.mxu0 0.0
  %468 = vmatpush2.msra.mxu0 0.0
  %469 = vmatprep.mubr.f32.mxu0 0.0
  %470 = vmatmul.mubr.f32.gmra.mxu0 %v403
  %v471 = vpop.f32.mrf.mxu0
  %v472 = vadd.f32 %v399, %v471
  %v473 = vpop.f32.mrf.mxu0
  %474 = vdwg.mxu0
  %v475 = vtanh.pop %v472
  %476 = vst [vmem:[%s8] sm:$0xff] %v475
  // Predicated region
  $region34: #{_lambda_.4} parent=0 // pred_check
    _
  $region35: #{_lambda_.4} parent=0 // pred_check_branch
    %478 = sbr.rel (0) target = $region37
  $region36: #{_lambda_.4} parent=0 // pred_region
    _
  $region37: #{_lambda_.4} parent=0 // pred_fallthru
    _
  // Predicated region
  $region38: #{_lambda_.4} parent=0 // pred_check
    _
  $region39: #{_lambda_.4} parent=0 // pred_check_branch
    %480 = sbr.rel (0) target = $region41
  $region40: #{_lambda_.4} parent=0 // pred_region
    _
  $region41: #{_lambda_.4} parent=0 // pred_fallthru
    _

// kernel: _lambda_.5
$region0: #{_lambda_.5}
  #allocation0 [shape = 'u32[]', space=smem, size = 0x4, offset = 0x4, fixed_abs, tag = 'smem constant byte address 0x4 - core index']
  #allocation1 [shape = 'u32[144,128]{1,0:T(1,128)}', space=vmem, size = 0x12000, scoped, tag = 'internal scratch']
  %s0 = inlined_call_operand.vmem [shape: f32[16,256], index: 0, kind: input, shape index: {}, may-alias: {0,1}]
  %s1 = inlined_call_operand.vmem [shape: f32[16,256], index: 1, kind: input, shape index: {}, may-alias: {0,1}]
  %s2 = inlined_call_operand.vmem [shape: f32[80,64], index: 2, kind: input, shape index: {}]
  %s3 = inlined_call_operand.vmem [shape: f32[80,128], index: 3, kind: output, shape index: {}]
  %s4 = sld [smem:[#allocation0]]
  $region98: #{_lambda_.5} parent=0
    _
  %s6 = ssub.s32 1, %s4
  %s7 = scalar_select 0, %s6, %s4
  $region1: #{_lambda_.5} parent=0
    #allocation2 [shape = 'u8[8192]{0}', space=vmem, size = 0x2000, scoped, tag = 'input window, operand 0, single buffered']
    #allocation3 [shape = 'u8[8192]{0}', space=vmem, size = 0x2000, scoped, tag = 'input window, operand 1, single buffered']
    // Predicated region
    $region2: #{_lambda_.5} parent=1 // pred_check
      _
    $region3: #{_lambda_.5} parent=1 // pred_check_branch
      %9 = sbr.rel (0) target = $region5
    $region4: #{_lambda_.5} parent=1 // pred_region
      // Predicated region
      $region6: #{_lambda_.5} parent=4 // pred_check
        _
      $region7: #{_lambda_.5} parent=4 // pred_check_branch
        %11 = sbr.rel (0) target = $region9
      $region8: #{_lambda_.5} parent=4 // pred_region
        // Predicated region
        $region10: #{_lambda_.5} parent=8 // pred_check
          _
        $region11: #{_lambda_.5} parent=8 // pred_check_branch
          %13 = sbr.rel (0) target = $region13
        $region12: #{_lambda_.5} parent=8 // pred_region
          // Predicated region
          $region25: #{_lambda_.5} parent=12 // pred_check
            _
          $region26: #{_lambda_.5} parent=12 // pred_check_branch
            %31 = sbr.rel (0) target = $region28
          $region27: #{_lambda_.5} parent=12 // pred_region
            loop: start=0, step=1, limit=1
            $region29: #{_lambda_.5} parent=27 // loop_pre_header
              _
            $region30: #{_lambda_.5} parent=27 // loop_header
              %s33 = sphi 0, %s37
              %p34 = scmp.ge.s32.totalorder %s33, 1
              %s38 = sphi %s0, %s0
              %s39 = sphi [#allocation2], [#allocation2]
            $region31: #{_lambda_.5} parent=27 // loop_header_branch
              %36 = sbr.rel (%p34) target = $region35
            $region32: #{_lambda_.5} parent=27 // loop_body
              %v40 = vld [vmem:[%s38] sm:$0xff]
              %41 = vst [vmem:[%s39] sm:$0xff] %v40
              %v42 = vld [vmem:[%s38 + $0x10] sm:$0xff]
              %43 = vst [vmem:[%s39 + $0x8] sm:$0xff] %v42
            $region33: #{_lambda_.5} parent=27 // loop_footer
              %s37 = sadd.s32 1, %s33
            $region34: #{_lambda_.5} parent=27 // loop_footer_branch
              %32 = sbr.rel target = $region30
            $region35: #{_lambda_.5} parent=27 // loop_exit
              _
          $region28: #{_lambda_.5} parent=12 // pred_fallthru
            _
          // Predicated region
          $region36: #{_lambda_.5} parent=12 // pred_check
            _
          $region37: #{_lambda_.5} parent=12 // pred_check_branch
            %45 = sbr.rel target = $region39
          $region38: #{_lambda_.5} parent=12 // pred_region
            _
          $region39: #{_lambda_.5} parent=12 // pred_fallthru
            _
        $region13: #{_lambda_.5} parent=8 // pred_fallthru
          _
        // Predicated region
        $region14: #{_lambda_.5} parent=8 // pred_check
          _
        $region15: #{_lambda_.5} parent=8 // pred_check_branch
          %15 = sbr.rel target = $region17
        $region16: #{_lambda_.5} parent=8 // pred_region
          %s17 = ssub.s32 256, 1
          loop: start=0, step=1, limit=1
          $region18: #{_lambda_.5} parent=16 // loop_pre_header
            _
          $region19: #{_lambda_.5} parent=16 // loop_header
            %s19 = sphi 0, %s23
            %p20 = scmp.ge.s32.totalorder %s19, 1
            %s24 = sphi %s0, %s0
            %s25 = sphi [#allocation2], [#allocation2]
          $region20: #{_lambda_.5} parent=16 // loop_header_branch
            %22 = sbr.rel (%p20) target = $region24
          $region21: #{_lambda_.5} parent=16 // loop_body
            %v26 = vld [vmem:[%s24] sm:%s17]
            %27 = vst [vmem:[%s25] sm:%s17] %v26
            %v28 = vld [vmem:[%s24 + $0x10] sm:%s17]
            %29 = vst [vmem:[%s25 + $0x8] sm:%s17] %v28
          $region22: #{_lambda_.5} parent=16 // loop_footer
            %s23 = sadd.s32 1, %s19
          $region23: #{_lambda_.5} parent=16 // loop_footer_branch
            %18 = sbr.rel target = $region19
          $region24: #{_lambda_.5} parent=16 // loop_exit
            _
        $region17: #{_lambda_.5} parent=8 // pred_fallthru
          _
      $region9: #{_lambda_.5} parent=4 // pred_fallthru
        _
      %46 = vnop
    $region5: #{_lambda_.5} parent=1 // pred_fallthru
      _
    // Predicated region
    $region40: #{_lambda_.5} parent=1 // pred_check
      _
    $region41: #{_lambda_.5} parent=1 // pred_check_branch
      %48 = sbr.rel (0) target = $region43
    $region42: #{_lambda_.5} parent=1 // pred_region
      %s49 = sadd.s32 0, 1
      %s50 = smul.addr %s49, 8
      %s51 = scalar_lea.vmem %s1, %s50
      // Predicated region
      $region44: #{_lambda_.5} parent=42 // pred_check
        _
      $region45: #{_lambda_.5} parent=42 // pred_check_branch
        %53 = sbr.rel (0) target = $region47
      $region46: #{_lambda_.5} parent=42 // pred_region
        // Predicated region
        $region48: #{_lambda_.5} parent=46 // pred_check
          _
        $region49: #{_lambda_.5} parent=46 // pred_check_branch
          %55 = sbr.rel (0) target = $region51
        $region50: #{_lambda_.5} parent=46 // pred_region
          // Predicated region
          $region63: #{_lambda_.5} parent=50 // pred_check
            _
          $region64: #{_lambda_.5} parent=50 // pred_check_branch
            %73 = sbr.rel (0) target = $region66
          $region65: #{_lambda_.5} parent=50 // pred_region
            loop: start=0, step=1, limit=1
            $region67: #{_lambda_.5} parent=65 // loop_pre_header
              _
            $region68: #{_lambda_.5} parent=65 // loop_header
              %s75 = sphi 0, %s79
              %p76 = scmp.ge.s32.totalorder %s75, 1
              %s80 = sphi %s51, %s51
              %s81 = sphi [#allocation3], [#allocation3]
            $region69: #{_lambda_.5} parent=65 // loop_header_branch
              %78 = sbr.rel (%p76) target = $region73
            $region70: #{_lambda_.5} parent=65 // loop_body
              %v82 = vld [vmem:[%s80] sm:$0xff]
              %83 = vst [vmem:[%s81] sm:$0xff] %v82
              %v84 = vld [vmem:[%s80 + $0x10] sm:$0xff]
              %85 = vst [vmem:[%s81 + $0x8] sm:$0xff] %v84
            $region71: #{_lambda_.5} parent=65 // loop_footer
              %s79 = sadd.s32 1, %s75
            $region72: #{_lambda_.5} parent=65 // loop_footer_branch
              %74 = sbr.rel target = $region68
            $region73: #{_lambda_.5} parent=65 // loop_exit
              _
          $region66: #{_lambda_.5} parent=50 // pred_fallthru
            _
          // Predicated region
          $region74: #{_lambda_.5} parent=50 // pred_check
            _
          $region75: #{_lambda_.5} parent=50 // pred_check_branch
            %87 = sbr.rel target = $region77
          $region76: #{_lambda_.5} parent=50 // pred_region
            _
          $region77: #{_lambda_.5} parent=50 // pred_fallthru
            _
        $region51: #{_lambda_.5} parent=46 // pred_fallthru
          _
        // Predicated region
        $region52: #{_lambda_.5} parent=46 // pred_check
          _
        $region53: #{_lambda_.5} parent=46 // pred_check_branch
          %57 = sbr.rel target = $region55
        $region54: #{_lambda_.5} parent=46 // pred_region
          %s59 = ssub.s32 256, 1
          loop: start=0, step=1, limit=1
          $region56: #{_lambda_.5} parent=54 // loop_pre_header
            _
          $region57: #{_lambda_.5} parent=54 // loop_header
            %s61 = sphi 0, %s65
            %p62 = scmp.ge.s32.totalorder %s61, 1
            %s66 = sphi %s51, %s51
            %s67 = sphi [#allocation3], [#allocation3]
          $region58: #{_lambda_.5} parent=54 // loop_header_branch
            %64 = sbr.rel (%p62) target = $region62
          $region59: #{_lambda_.5} parent=54 // loop_body
            %v68 = vld [vmem:[%s66] sm:%s59]
            %69 = vst [vmem:[%s67] sm:%s59] %v68
            %v70 = vld [vmem:[%s66 + $0x10] sm:%s59]
            %71 = vst [vmem:[%s67 + $0x8] sm:%s59] %v70
          $region60: #{_lambda_.5} parent=54 // loop_footer
            %s65 = sadd.s32 1, %s61
          $region61: #{_lambda_.5} parent=54 // loop_footer_branch
            %60 = sbr.rel target = $region57
          $region62: #{_lambda_.5} parent=54 // loop_exit
            _
        $region55: #{_lambda_.5} parent=46 // pred_fallthru
          _
      $region47: #{_lambda_.5} parent=42 // pred_fallthru
        _
      %88 = vnop
    $region43: #{_lambda_.5} parent=1 // pred_fallthru
      _
    // Predicated region
    $region78: #{_lambda_.5} parent=1 // pred_check
      _
    $region79: #{_lambda_.5} parent=1 // pred_check_branch
      %90 = sbr.rel (0) target = $region81
    $region80: #{_lambda_.5} parent=1 // pred_region
      _
    $region81: #{_lambda_.5} parent=1 // pred_fallthru
      _
    // Predicated region
    $region82: #{_lambda_.5} parent=1 // pred_check
      _
    $region83: #{_lambda_.5} parent=1 // pred_check_branch
      %92 = sbr.rel (0) target = $region85
    $region84: #{_lambda_.5} parent=1 // pred_region
      _
    $region85: #{_lambda_.5} parent=1 // pred_fallthru
      _
    // Predicated region
    $region86: #{_lambda_.5} parent=1 // pred_check
      _
    $region87: #{_lambda_.5} parent=1 // pred_check_branch
      %94 = sbr.rel (0) target = $region89
    $region88: #{_lambda_.5} parent=1 // pred_region
      _
    $region89: #{_lambda_.5} parent=1 // pred_fallthru
      _
    %s95 = sadd.s32 0, 1
    %v96 = vld [vmem:[#allocation2] sm:$0xff]
    %v97 = vld [vmem:[#allocation2 + $0x8] sm:$0xff]
    %v98 = vld [vmem:[#allocation3] sm:$0xff]
    %v99 = vld [vmem:[#allocation3 + $0x8] sm:$0xff]
    %100 = vrot.lane.b32.xlu0 %v96, 127
    %v101 = vpop.permute.xlu0 %100
    %102 = vrot.lane.b32.xlu0 %v97, 127
    %v103 = vpop.permute.xlu0 %102
    %104 = vrot.lane.b32.xlu0 %v98, 127
    %v105 = vpop.permute.xlu0 %104
    %106 = vrot.lane.b32.xlu0 %v99, 127
    %v107 = vpop.permute.xlu0 %106
    %v108 = vlaneseq
    %v109 = vand.u32 %v108, 127
    %vm110 = vcmp.lt.s32.totalorder %v109, 127
    %v111 = vsel %vm110, %v101, %v105
    %v112 = vsel %vm110, %v103, %v107
    %113 = vrot.lane.b32.xlu0 %v96, 126
    %v114 = vpop.permute.xlu0 %113
    %115 = vrot.lane.b32.xlu0 %v97, 126
    %v116 = vpop.permute.xlu0 %115
    %117 = vrot.lane.b32.xlu0 %v98, 126
    %v118 = vpop.permute.xlu0 %117
    %119 = vrot.lane.b32.xlu0 %v99, 126
    %v120 = vpop.permute.xlu0 %119
    %vm121 = vcmp.lt.s32.totalorder %v109, 126
    %v122 = vsel %vm121, %v114, %v118
    %v123 = vsel %vm121, %v116, %v120
    %124 = vrot.lane.b32.xlu0 %v96, 125
    %v125 = vpop.permute.xlu0 %124
    %126 = vrot.lane.b32.xlu0 %v97, 125
    %v127 = vpop.permute.xlu0 %126
    %128 = vrot.lane.b32.xlu0 %v98, 125
    %v129 = vpop.permute.xlu0 %128
    %130 = vrot.lane.b32.xlu0 %v99, 125
    %v131 = vpop.permute.xlu0 %130
    %vm132 = vcmp.lt.s32.totalorder %v109, 125
    %v133 = vsel %vm132, %v125, %v129
    %v134 = vsel %vm132, %v127, %v131
    %v135 = vld [vmem:[%s2] sm:$0xff]
    %v136 = vld [vmem:[%s2 + $0x8] sm:$0xff]
    %v137 = vld [vmem:[%s2 + $0x10] sm:$0xff]
    %v138 = vld [vmem:[%s2 + $0x18] sm:$0xff]
    %v139 = vld [vmem:[%s2 + $0x20] sm:$0xff]
    %v140 = vld [vmem:[%s2 + $0x28] sm:$0xff]
    %v141 = vld [vmem:[%s2 + $0x30] sm:$0xff]
    %v142 = vld [vmem:[%s2 + $0x38] sm:$0xff]
    %v143 = vld [vmem:[%s2 + $0x40] sm:$0xff]
    %v144 = vld [vmem:[%s2 + $0x48] sm:$0xff]
    %vm145 = vcmask 523264
    %v147 = vsel %vm145, %v135, 0
    %v150 = vsel %vm145, %v136, 0
    %v153 = vsel %vm145, %v137, 0
    %v156 = vsel %vm145, %v138, 0
    %v159 = vsel %vm145, %v139, 0
    %v162 = vsel %vm145, %v140, 0
    %v165 = vsel %vm145, %v141, 0
    %v168 = vsel %vm145, %v142, 0
    %v171 = vsel %vm145, %v143, 0
    %v174 = vsel %vm145, %v144, 0
    %176 = vmatprep.subr.mxu0 0.0
    %177 = vmatpush1.msra.mxu0 0.0
    %178 = vmatprep.subr.mxu0 0.0
    %179 = vmatpush1.msra.mxu0 0.0
    %180 = vmatprep.subr.mxu0 0.0
    %181 = vmatpush1.msra.mxu0 0.0
    %182 = vmatprep.subr.mxu0 0.0
    %183 = vmatpush1.msra.mxu0 0.0
    %184 = vmatprep.subr.mxu0 0.0
    %185 = vmatpush1.msra.mxu0 0.0
    %186 = vmatprep.subr.mxu0 0.0
    %187 = vmatpush1.msra.mxu0 0.0
    %188 = vmatprep.subr.mxu0 0.0
    %189 = vmatpush1.msra.mxu0 0.0
    %190 = vmatprep.subr.mxu0 0.0
    %191 = vmatpush1.msra.mxu0 0.0
    %192 = vmatprep.subr.mxu0 0.0
    %193 = vmatpush1.msra.mxu0 %v134
    %194 = vmatprep.subr.mxu0 0.0
    %195 = vmatpush1.msra.mxu0 %v133
    %196 = vmatprep.subr.mxu0 0.0
    %197 = vmatpush1.msra.mxu0 %v123
    %198 = vmatprep.subr.mxu0 0.0
    %199 = vmatpush1.msra.mxu0 %v122
    %200 = vmatprep.subr.mxu0 0.0
    %201 = vmatpush1.msra.mxu0 %v112
    %202 = vmatprep.subr.mxu0 0.0
    %203 = vmatpush1.msra.mxu0 %v111
    %204 = vmatprep.subr.mxu0 0.0
    %205 = vmatpush1.msra.mxu0 %v97
    %206 = vmatprep.subr.mxu0 0.0
    %207 = vmatpush1.msra.mxu0 %v96
    %208 = vmatprep.subr.mxu0 0.0
    %209 = vmatpush2.msra.mxu0 0.0
    %210 = vmatprep.subr.mxu0 0.0
    %211 = vmatpush2.msra.mxu0 0.0
    %212 = vmatprep.subr.mxu0 0.0
    %213 = vmatpush2.msra.mxu0 0.0
    %214 = vmatprep.subr.mxu0 0.0
    %215 = vmatpush2.msra.mxu0 0.0
    %216 = vmatprep.subr.mxu0 0.0
    %217 = vmatpush2.msra.mxu0 0.0
    %218 = vmatprep.subr.mxu0 0.0
    %219 = vmatpush2.msra.mxu0 0.0
    %220 = vmatprep.subr.mxu0 0.0
    %221 = vmatpush2.msra.mxu0 0.0
    %222 = vmatprep.subr.mxu0 0.0
    %223 = vmatpush2.msra.mxu0 0.0
    %224 = vmatprep.subr.mxu0 0.0
    %225 = vmatpush2.msra.mxu0 0.0
    %226 = vmatprep.subr.mxu0 0.0
    %227 = vmatpush2.msra.mxu0 0.0
    %228 = vmatprep.subr.mxu0 0.0
    %229 = vmatpush2.msra.mxu0 0.0
    %230 = vmatprep.subr.mxu0 0.0
    %231 = vmatpush2.msra.mxu0 0.0
    %232 = vmatprep.subr.mxu0 0.0
    %233 = vmatpush2.msra.mxu0 0.0
    %234 = vmatprep.subr.mxu0 0.0
    %235 = vmatpush2.msra.mxu0 0.0
    %236 = vmatprep.subr.mxu0 0.0
    %237 = vmatpush2.msra.mxu0 0.0
    %238 = vmatprep.subr.mxu0 0.0
    %239 = vmatpush2.msra.mxu0 0.0
    %240 = vmatprep.mubr.f32.mxu0 0.0
    %241 = vmatmul.mubr.f32.gmra.mxu0 %v147
    %v242 = vpop.f32.mrf.mxu0
    %v243 = vadd.f32 0.0, %v242
    %v244 = vpop.f32.mrf.mxu0
    %245 = vmatprep.mubr.f32.mxu0 0.0
    %246 = vmatmul.mubr.f32.gmra.mxu0 %v150
    %v247 = vpop.f32.mrf.mxu0
    %v248 = vadd.f32 0.0, %v247
    %v249 = vpop.f32.mrf.mxu0
    %250 = vmatprep.mubr.f32.mxu0 0.0
    %251 = vmatmul.mubr.f32.gmra.mxu0 %v153
    %v252 = vpop.f32.mrf.mxu0
    %v253 = vadd.f32 0.0, %v252
    %v254 = vpop.f32.mrf.mxu0
    %255 = vmatprep.mubr.f32.mxu0 0.0
    %256 = vmatmul.mubr.f32.gmra.mxu0 %v156
    %v257 = vpop.f32.mrf.mxu0
    %v258 = vadd.f32 0.0, %v257
    %v259 = vpop.f32.mrf.mxu0
    %260 = vmatprep.mubr.f32.mxu0 0.0
    %261 = vmatmul.mubr.f32.gmra.mxu0 %v159
    %v262 = vpop.f32.mrf.mxu0
    %v263 = vadd.f32 0.0, %v262
    %v264 = vpop.f32.mrf.mxu0
    %265 = vmatprep.mubr.f32.mxu0 0.0
    %266 = vmatmul.mubr.f32.gmra.mxu0 %v162
    %v267 = vpop.f32.mrf.mxu0
    %v268 = vadd.f32 0.0, %v267
    %v269 = vpop.f32.mrf.mxu0
    %270 = vmatprep.mubr.f32.mxu0 0.0
    %271 = vmatmul.mubr.f32.gmra.mxu0 %v165
    %v272 = vpop.f32.mrf.mxu0
    %v273 = vadd.f32 0.0, %v272
    %v274 = vpop.f32.mrf.mxu0
    %275 = vmatprep.mubr.f32.mxu0 0.0
    %276 = vmatmul.mubr.f32.gmra.mxu0 %v168
    %v277 = vpop.f32.mrf.mxu0
    %v278 = vadd.f32 0.0, %v277
    %v279 = vpop.f32.mrf.mxu0
    %280 = vmatprep.mubr.f32.mxu0 0.0
    %281 = vmatmul.mubr.f32.gmra.mxu0 %v171
    %v282 = vpop.f32.mrf.mxu0
    %v283 = vadd.f32 0.0, %v282
    %v284 = vpop.f32.mrf.mxu0
    %285 = vmatprep.mubr.f32.mxu0 0.0
    %286 = vmatmul.mubr.f32.gmra.mxu0 %v174
    %v287 = vpop.f32.mrf.mxu0
    %v288 = vadd.f32 0.0, %v287
    %v289 = vpop.f32.mrf.mxu0
    %290 = vdwg.mxu0
    %s291 = smul.u32 0, 128
    %v292 = vstv %s291
    %v293 = vadd.s32 %v109, %v292
    %vm294 = vcmp.lt.s32.totalorder %v293, 31
    %v295 = vsel %vm294, 1, 0
    %v296 = vcvt.s32.f32 %v295
    %v297 = vmul.f32 %v243, %v243
    %v298 = vmul.f32 %v248, %v248
    %v299 = vmul.f32 %v253, %v253
    %v300 = vmul.f32 %v258, %v258
    %v301 = vmul.f32 %v263, %v263
    %v302 = vmul.f32 %v268, %v268
    %v303 = vmul.f32 %v273, %v273
    %v304 = vmul.f32 %v278, %v278
    %v305 = vmul.f32 %v283, %v283
    %v306 = vmul.f32 %v288, %v288
    %v307 = vmul.f32 %v297, %v296
    %v308 = vmul.f32 %v298, %v296
    %v309 = vmul.f32 %v299, %v296
    %v310 = vmul.f32 %v300, %v296
    %v311 = vmul.f32 %v301, %v296
    %v312 = vmul.f32 %v302, %v296
    %v313 = vmul.f32 %v303, %v296
    %v314 = vmul.f32 %v304, %v296
    %v315 = vmul.f32 %v305, %v296
    %v316 = vmul.f32 %v306, %v296
    %317 = vadd.xlane.f32.xlu0 %v307
    %v318 = vpop.xlane.xlu0 %317
    %319 = vadd.xlane.f32.xlu0 %v308
    %v320 = vpop.xlane.xlu0 %319
    %321 = vadd.xlane.f32.xlu0 %v309
    %v322 = vpop.xlane.xlu0 %321
    %323 = vadd.xlane.f32.xlu0 %v310
    %v324 = vpop.xlane.xlu0 %323
    %325 = vadd.xlane.f32.xlu0 %v311
    %v326 = vpop.xlane.xlu0 %325
    %327 = vadd.xlane.f32.xlu0 %v312
    %v328 = vpop.xlane.xlu0 %327
    %329 = vadd.xlane.f32.xlu0 %v313
    %v330 = vpop.xlane.xlu0 %329
    %331 = vadd.xlane.f32.xlu0 %v314
    %v332 = vpop.xlane.xlu0 %331
    %333 = vadd.xlane.f32.xlu0 %v315
    %v334 = vpop.xlane.xlu0 %333
    %335 = vadd.xlane.f32.xlu0 %v316
    %v336 = vpop.xlane.xlu0 %335
    %337 = vst [vmem:[%s3] sm:$0xff] %v318
    %338 = vst [vmem:[%s3 + $0x8] sm:$0xff] %v320
    %339 = vst [vmem:[%s3 + $0x10] sm:$0xff] %v322
    %340 = vst [vmem:[%s3 + $0x18] sm:$0xff] %v324
    %341 = vst [vmem:[%s3 + $0x20] sm:$0xff] %v326
    %342 = vst [vmem:[%s3 + $0x28] sm:$0xff] %v328
    %343 = vst [vmem:[%s3 + $0x30] sm:$0xff] %v330
    %344 = vst [vmem:[%s3 + $0x38] sm:$0xff] %v332
    %345 = vst [vmem:[%s3 + $0x40] sm:$0xff] %v334
    %346 = vst [vmem:[%s3 + $0x48] sm:$0xff] %v336
    // Predicated region
    $region90: #{_lambda_.5} parent=1 // pred_check
      _
    $region91: #{_lambda_.5} parent=1 // pred_check_branch
      %348 = sbr.rel (0) target = $region93
    $region92: #{_lambda_.5} parent=1 // pred_region
      _
    $region93: #{_lambda_.5} parent=1 // pred_fallthru
      _
    // Predicated region
    $region94: #{_lambda_.5} parent=1 // pred_check
      _
    $region95: #{_lambda_.5} parent=1 // pred_check_branch
      %350 = sbr.rel (0) target = $region97
    $region96: #{_lambda_.5} parent=1 // pred_region
      _
    $region97: #{_lambda_.5} parent=1 // pred_fallthru
      _

// kernel: _lambda_.7
$region0: #{_lambda_.7}
  #allocation0 [shape = 'u32[]', space=smem, size = 0x4, offset = 0x4, fixed_abs, tag = 'smem constant byte address 0x4 - core index']
  #allocation1 [shape = 'u32[144,128]{1,0:T(1,128)}', space=vmem, size = 0x12000, scoped, tag = 'internal scratch']
  %s0 = inlined_call_operand.vmem [shape: f32[16,256], index: 0, kind: input, shape index: {}]
  %s1 = inlined_call_operand.vmem [shape: f32[16,128], index: 1, kind: input, shape index: {}]
  %s2 = inlined_call_operand.vmem [shape: f32[16,128], index: 2, kind: input, shape index: {}]
  %s3 = inlined_call_operand.vmem [shape: s16[16,128], index: 3, kind: output, shape index: {}]
  %s4 = sld [smem:[#allocation0]]
  $region60: #{_lambda_.7} parent=0
    _
  %s6 = ssub.s32 1, %s4
  %s7 = scalar_select 0, %s6, %s4
  $region1: #{_lambda_.7} parent=0
    #allocation2 [shape = 'u8[8192]{0}', space=vmem, size = 0x2000, scoped, tag = 'input window, operand 0, single buffered']
    // Predicated region
    $region2: #{_lambda_.7} parent=1 // pred_check
      _
    $region3: #{_lambda_.7} parent=1 // pred_check_branch
      %9 = sbr.rel (0) target = $region5
    $region4: #{_lambda_.7} parent=1 // pred_region
      // Predicated region
      $region6: #{_lambda_.7} parent=4 // pred_check
        _
      $region7: #{_lambda_.7} parent=4 // pred_check_branch
        %11 = sbr.rel (0) target = $region9
      $region8: #{_lambda_.7} parent=4 // pred_region
        // Predicated region
        $region10: #{_lambda_.7} parent=8 // pred_check
          _
        $region11: #{_lambda_.7} parent=8 // pred_check_branch
          %13 = sbr.rel (0) target = $region13
        $region12: #{_lambda_.7} parent=8 // pred_region
          // Predicated region
          $region25: #{_lambda_.7} parent=12 // pred_check
            _
          $region26: #{_lambda_.7} parent=12 // pred_check_branch
            %31 = sbr.rel (0) target = $region28
          $region27: #{_lambda_.7} parent=12 // pred_region
            loop: start=0, step=1, limit=1
            $region29: #{_lambda_.7} parent=27 // loop_pre_header
              _
            $region30: #{_lambda_.7} parent=27 // loop_header
              %s33 = sphi 0, %s37
              %p34 = scmp.ge.s32.totalorder %s33, 1
              %s38 = sphi %s0, %s0
              %s39 = sphi [#allocation2], [#allocation2]
            $region31: #{_lambda_.7} parent=27 // loop_header_branch
              %36 = sbr.rel (%p34) target = $region35
            $region32: #{_lambda_.7} parent=27 // loop_body
              %v40 = vld [vmem:[%s38] sm:$0xff]
              %41 = vst [vmem:[%s39] sm:$0xff] %v40
              %v42 = vld [vmem:[%s38 + $0x10] sm:$0xff]
              %43 = vst [vmem:[%s39 + $0x8] sm:$0xff] %v42
            $region33: #{_lambda_.7} parent=27 // loop_footer
              %s37 = sadd.s32 1, %s33
            $region34: #{_lambda_.7} parent=27 // loop_footer_branch
              %32 = sbr.rel target = $region30
            $region35: #{_lambda_.7} parent=27 // loop_exit
              _
          $region28: #{_lambda_.7} parent=12 // pred_fallthru
            _
          // Predicated region
          $region36: #{_lambda_.7} parent=12 // pred_check
            _
          $region37: #{_lambda_.7} parent=12 // pred_check_branch
            %45 = sbr.rel target = $region39
          $region38: #{_lambda_.7} parent=12 // pred_region
            _
          $region39: #{_lambda_.7} parent=12 // pred_fallthru
            _
        $region13: #{_lambda_.7} parent=8 // pred_fallthru
          _
        // Predicated region
        $region14: #{_lambda_.7} parent=8 // pred_check
          _
        $region15: #{_lambda_.7} parent=8 // pred_check_branch
          %15 = sbr.rel target = $region17
        $region16: #{_lambda_.7} parent=8 // pred_region
          %s17 = ssub.s32 256, 1
          loop: start=0, step=1, limit=1
          $region18: #{_lambda_.7} parent=16 // loop_pre_header
            _
          $region19: #{_lambda_.7} parent=16 // loop_header
            %s19 = sphi 0, %s23
            %p20 = scmp.ge.s32.totalorder %s19, 1
            %s24 = sphi %s0, %s0
            %s25 = sphi [#allocation2], [#allocation2]
          $region20: #{_lambda_.7} parent=16 // loop_header_branch
            %22 = sbr.rel (%p20) target = $region24
          $region21: #{_lambda_.7} parent=16 // loop_body
            %v26 = vld [vmem:[%s24] sm:%s17]
            %27 = vst [vmem:[%s25] sm:%s17] %v26
            %v28 = vld [vmem:[%s24 + $0x10] sm:%s17]
            %29 = vst [vmem:[%s25 + $0x8] sm:%s17] %v28
          $region22: #{_lambda_.7} parent=16 // loop_footer
            %s23 = sadd.s32 1, %s19
          $region23: #{_lambda_.7} parent=16 // loop_footer_branch
            %18 = sbr.rel target = $region19
          $region24: #{_lambda_.7} parent=16 // loop_exit
            _
        $region17: #{_lambda_.7} parent=8 // pred_fallthru
          _
      $region9: #{_lambda_.7} parent=4 // pred_fallthru
        _
      %46 = vnop
    $region5: #{_lambda_.7} parent=1 // pred_fallthru
      _
    // Predicated region
    $region40: #{_lambda_.7} parent=1 // pred_check
      _
    $region41: #{_lambda_.7} parent=1 // pred_check_branch
      %48 = sbr.rel (0) target = $region43
    $region42: #{_lambda_.7} parent=1 // pred_region
      _
    $region43: #{_lambda_.7} parent=1 // pred_fallthru
      _
    // Predicated region
    $region44: #{_lambda_.7} parent=1 // pred_check
      _
    $region45: #{_lambda_.7} parent=1 // pred_check_branch
      %50 = sbr.rel (0) target = $region47
    $region46: #{_lambda_.7} parent=1 // pred_region
      _
    $region47: #{_lambda_.7} parent=1 // pred_fallthru
      _
    // Predicated region
    $region48: #{_lambda_.7} parent=1 // pred_check
      _
    $region49: #{_lambda_.7} parent=1 // pred_check_branch
      %52 = sbr.rel (0) target = $region51
    $region50: #{_lambda_.7} parent=1 // pred_region
      _
    $region51: #{_lambda_.7} parent=1 // pred_fallthru
      _
    %v53 = vlaneseq
    %v54 = vshrl.u32 %v53, 7
    %v55 = vadd.s32 %v54, 8
    %v56 = vlaneseq
    %v57 = vand.u32 %v56, 127
    %s58 = smul.u32 0, 128
    %v59 = vstv %s58
    %v60 = vadd.s32 %v57, %v59
    %v61 = vmul.u32 %v60, 16
    %v62 = vadd.s32 %v61, %v54
    %v63 = vadd.s32 %v61, %v55
    %v64 = vsub.s32 %v62, 32
    %v65 = vsub.s32 %v63, 32
    %v66 = vcvt.s32.f32 %v64
    %v67 = vcvt.s32.f32 %v65
    %v68 = vmul.f32 %v66, 0.021276595
    %v69 = vmul.f32 %v67, 0.021276595
    %v70 = vmax.f32 %v68, 0.0
    %v71 = vmax.f32 %v69, 0.0
    %v72 = vmin.f32 %v70, 1.0
    %v73 = vmin.f32 %v71, 1.0
    %v74 = vld [vmem:[#allocation2] sm:$0xff]
    %v75 = vld [vmem:[#allocation2 + $0x8] sm:$0xff]
    %v76 = vsub.f32 1.0, %v72
    %v77 = vsub.f32 1.0, %v73
    %v78 = vmul.f32 %v74, %v76
    %v79 = vmul.f32 %v75, %v77
    %v80 = vld [vmem:[%s1] sm:$0xff]
    %v81 = vld [vmem:[%s1 + $0x8] sm:$0xff]
    %v82 = vld [vmem:[%s2] sm:$0xff]
    %v83 = vld [vmem:[%s2 + $0x8] sm:$0xff]
    %v84 = vmul.f32 %v80, %v82
    %v85 = vmul.f32 %v81, %v83
    %v86 = vmul.f32 %v84, %v72
    %v87 = vmul.f32 %v85, %v73
    %v88 = vadd.f32 %v78, %v86
    %v89 = vadd.f32 %v79, %v87
    %v90 = vmax.f32 %v88, -1.0
    %v91 = vmax.f32 %v89, -1.0
    %v92 = vmin.f32 %v90, 1.0
    %v93 = vmin.f32 %v91, 1.0
    %v94 = vmul.f32 %v92, 32767.0
    %v95 = vmul.f32 %v93, 32767.0
    %v96 = vmax.f32 %v94, -32768.0
    %v97 = vmax.f32 %v95, -32768.0
    %v98 = vmin.f32 %v96, 32767.0
    %v99 = vmin.f32 %v97, 32767.0
    %v100 = vcvt.f32.s32.to.zero.pseudo %v98
    %v101 = vcvt.f32.s32.to.zero.pseudo %v99
    %v102 = vpack.c.b16 %v100, %v100
    %v103 = vpack.c.b16 %v101, %v101
    %104 = vst [vmem:[%s3] sm:$0xf] %v102
    %105 = vst [vmem:[%s3 + $0x4] sm:$0xf] %v103
    // Predicated region
    $region52: #{_lambda_.7} parent=1 // pred_check
      _
    $region53: #{_lambda_.7} parent=1 // pred_check_branch
      %107 = sbr.rel (0) target = $region55
    $region54: #{_lambda_.7} parent=1 // pred_region
      _
    $region55: #{_lambda_.7} parent=1 // pred_fallthru
      _
    // Predicated region
    $region56: #{_lambda_.7} parent=1 // pred_check
      _
    $region57: #{_lambda_.7} parent=1 // pred_check_branch
      %109 = sbr.rel (0) target = $region59
    $region58: #{_lambda_.7} parent=1 // pred_region
      _
    $region59: #{_lambda_.7} parent=1 // pred_fallthru
      _

// kernel: _lambda_.6
$region0: #{_lambda_.6}
  #allocation0 [shape = 'u32[]', space=smem, size = 0x4, offset = 0x4, fixed_abs, tag = 'smem constant byte address 0x4 - core index']
  #allocation1 [shape = 'u32[144,128]{1,0:T(1,128)}', space=vmem, size = 0x12000, scoped, tag = 'internal scratch']
  %s0 = inlined_call_operand.vmem [shape: f32[16,256], index: 0, kind: input, shape index: {}, may-alias: {0,1}]
  %s1 = inlined_call_operand.vmem [shape: f32[16,256], index: 1, kind: input, shape index: {}, may-alias: {0,1}]
  %s2 = inlined_call_operand.vmem [shape: f32[16,256], index: 2, kind: input, shape index: {}, may-alias: {2,3}]
  %s3 = inlined_call_operand.vmem [shape: f32[16,256], index: 3, kind: input, shape index: {}, may-alias: {2,3}]
  %s4 = inlined_call_operand.vmem [shape: f32[80,1], index: 4, kind: input, shape index: {}]
  %s5 = inlined_call_operand.vmem [shape: f32[80,64], index: 5, kind: input, shape index: {}]
  %s6 = inlined_call_operand.vmem [shape: f32[64,80], index: 6, kind: input, shape index: {}]
  %s7 = inlined_call_operand.vmem [shape: f32[16,128], index: 7, kind: output, shape index: {0}]
  %s8 = inlined_call_operand.hbm [shape: f32[16,128], index: 8, kind: output, shape index: {1}]
  %9 = xla_tuple %s7, %s8
  %s10 = sld [smem:[#allocation0]]
  $region198: #{_lambda_.6} parent=0
    _
  %s12 = ssub.s32 1, %s10
  %s13 = scalar_select 0, %s12, %s10
  $region1: #{_lambda_.6} parent=0
    #allocation2 [shape = 'u8[8192]{0}', space=vmem, size = 0x2000, scoped, tag = 'input window, operand 0, single buffered']
    #allocation3 [shape = 'u8[8192]{0}', space=vmem, size = 0x2000, scoped, tag = 'input window, operand 1, single buffered']
    #allocation4 [shape = 'u8[8192]{0}', space=vmem, size = 0x2000, scoped, tag = 'input window, operand 2, single buffered']
    #allocation5 [shape = 'u8[8192]{0}', space=vmem, size = 0x2000, scoped, tag = 'input window, operand 3, single buffered']
    #allocation6 [shape = 'u8[8192]{0}', space=vmem, size = 0x2000, scoped, tag = 'output window, operand 1, single buffered']
    #allocation7 [shape = 's32[1]{0}', space=sflag, size = 0x4, scoped, tag = 'scoped memory for _lambda_.6']
    %14 = vsyncpa [#allocation7], 0
    // Predicated region
    $region2: #{_lambda_.6} parent=1 // pred_check
      _
    $region3: #{_lambda_.6} parent=1 // pred_check_branch
      %16 = sbr.rel (0) target = $region5
    $region4: #{_lambda_.6} parent=1 // pred_region
      // Predicated region
      $region6: #{_lambda_.6} parent=4 // pred_check
        _
      $region7: #{_lambda_.6} parent=4 // pred_check_branch
        %18 = sbr.rel (0) target = $region9
      $region8: #{_lambda_.6} parent=4 // pred_region
        // Predicated region
        $region10: #{_lambda_.6} parent=8 // pred_check
          _
        $region11: #{_lambda_.6} parent=8 // pred_check_branch
          %20 = sbr.rel (0) target = $region13
        $region12: #{_lambda_.6} parent=8 // pred_region
          // Predicated region
          $region25: #{_lambda_.6} parent=12 // pred_check
            _
          $region26: #{_lambda_.6} parent=12 // pred_check_branch
            %38 = sbr.rel (0) target = $region28
          $region27: #{_lambda_.6} parent=12 // pred_region
            loop: start=0, step=1, limit=1
            $region29: #{_lambda_.6} parent=27 // loop_pre_header
              _
            $region30: #{_lambda_.6} parent=27 // loop_header
              %s40 = sphi 0, %s44
              %p41 = scmp.ge.s32.totalorder %s40, 1
              %s45 = sphi %s0, %s0
              %s46 = sphi [#allocation2], [#allocation2]
            $region31: #{_lambda_.6} parent=27 // loop_header_branch
              %43 = sbr.rel (%p41) target = $region35
            $region32: #{_lambda_.6} parent=27 // loop_body
              %v47 = vld [vmem:[%s45] sm:$0xff]
              %48 = vst [vmem:[%s46] sm:$0xff] %v47
              %v49 = vld [vmem:[%s45 + $0x10] sm:$0xff]
              %50 = vst [vmem:[%s46 + $0x8] sm:$0xff] %v49
            $region33: #{_lambda_.6} parent=27 // loop_footer
              %s44 = sadd.s32 1, %s40
            $region34: #{_lambda_.6} parent=27 // loop_footer_branch
              %39 = sbr.rel target = $region30
            $region35: #{_lambda_.6} parent=27 // loop_exit
              _
          $region28: #{_lambda_.6} parent=12 // pred_fallthru
            _
          // Predicated region
          $region36: #{_lambda_.6} parent=12 // pred_check
            _
          $region37: #{_lambda_.6} parent=12 // pred_check_branch
            %52 = sbr.rel target = $region39
          $region38: #{_lambda_.6} parent=12 // pred_region
            _
          $region39: #{_lambda_.6} parent=12 // pred_fallthru
            _
        $region13: #{_lambda_.6} parent=8 // pred_fallthru
          _
        // Predicated region
        $region14: #{_lambda_.6} parent=8 // pred_check
          _
        $region15: #{_lambda_.6} parent=8 // pred_check_branch
          %22 = sbr.rel target = $region17
        $region16: #{_lambda_.6} parent=8 // pred_region
          %s24 = ssub.s32 256, 1
          loop: start=0, step=1, limit=1
          $region18: #{_lambda_.6} parent=16 // loop_pre_header
            _
          $region19: #{_lambda_.6} parent=16 // loop_header
            %s26 = sphi 0, %s30
            %p27 = scmp.ge.s32.totalorder %s26, 1
            %s31 = sphi %s0, %s0
            %s32 = sphi [#allocation2], [#allocation2]
          $region20: #{_lambda_.6} parent=16 // loop_header_branch
            %29 = sbr.rel (%p27) target = $region24
          $region21: #{_lambda_.6} parent=16 // loop_body
            %v33 = vld [vmem:[%s31] sm:%s24]
            %34 = vst [vmem:[%s32] sm:%s24] %v33
            %v35 = vld [vmem:[%s31 + $0x10] sm:%s24]
            %36 = vst [vmem:[%s32 + $0x8] sm:%s24] %v35
          $region22: #{_lambda_.6} parent=16 // loop_footer
            %s30 = sadd.s32 1, %s26
          $region23: #{_lambda_.6} parent=16 // loop_footer_branch
            %25 = sbr.rel target = $region19
          $region24: #{_lambda_.6} parent=16 // loop_exit
            _
        $region17: #{_lambda_.6} parent=8 // pred_fallthru
          _
      $region9: #{_lambda_.6} parent=4 // pred_fallthru
        _
      %53 = vnop
    $region5: #{_lambda_.6} parent=1 // pred_fallthru
      _
    // Predicated region
    $region40: #{_lambda_.6} parent=1 // pred_check
      _
    $region41: #{_lambda_.6} parent=1 // pred_check_branch
      %55 = sbr.rel (0) target = $region43
    $region42: #{_lambda_.6} parent=1 // pred_region
      %s56 = sadd.s32 0, 1
      %s57 = smul.addr %s56, 8
      %s58 = scalar_lea.vmem %s1, %s57
      // Predicated region
      $region44: #{_lambda_.6} parent=42 // pred_check
        _
      $region45: #{_lambda_.6} parent=42 // pred_check_branch
        %60 = sbr.rel (0) target = $region47
      $region46: #{_lambda_.6} parent=42 // pred_region
        // Predicated region
        $region48: #{_lambda_.6} parent=46 // pred_check
          _
        $region49: #{_lambda_.6} parent=46 // pred_check_branch
          %62 = sbr.rel (0) target = $region51
        $region50: #{_lambda_.6} parent=46 // pred_region
          // Predicated region
          $region63: #{_lambda_.6} parent=50 // pred_check
            _
          $region64: #{_lambda_.6} parent=50 // pred_check_branch
            %80 = sbr.rel (0) target = $region66
          $region65: #{_lambda_.6} parent=50 // pred_region
            loop: start=0, step=1, limit=1
            $region67: #{_lambda_.6} parent=65 // loop_pre_header
              _
            $region68: #{_lambda_.6} parent=65 // loop_header
              %s82 = sphi 0, %s86
              %p83 = scmp.ge.s32.totalorder %s82, 1
              %s87 = sphi %s58, %s58
              %s88 = sphi [#allocation3], [#allocation3]
            $region69: #{_lambda_.6} parent=65 // loop_header_branch
              %85 = sbr.rel (%p83) target = $region73
            $region70: #{_lambda_.6} parent=65 // loop_body
              %v89 = vld [vmem:[%s87] sm:$0xff]
              %90 = vst [vmem:[%s88] sm:$0xff] %v89
              %v91 = vld [vmem:[%s87 + $0x10] sm:$0xff]
              %92 = vst [vmem:[%s88 + $0x8] sm:$0xff] %v91
            $region71: #{_lambda_.6} parent=65 // loop_footer
              %s86 = sadd.s32 1, %s82
            $region72: #{_lambda_.6} parent=65 // loop_footer_branch
              %81 = sbr.rel target = $region68
            $region73: #{_lambda_.6} parent=65 // loop_exit
              _
          $region66: #{_lambda_.6} parent=50 // pred_fallthru
            _
          // Predicated region
          $region74: #{_lambda_.6} parent=50 // pred_check
            _
          $region75: #{_lambda_.6} parent=50 // pred_check_branch
            %94 = sbr.rel target = $region77
          $region76: #{_lambda_.6} parent=50 // pred_region
            _
          $region77: #{_lambda_.6} parent=50 // pred_fallthru
            _
        $region51: #{_lambda_.6} parent=46 // pred_fallthru
          _
        // Predicated region
        $region52: #{_lambda_.6} parent=46 // pred_check
          _
        $region53: #{_lambda_.6} parent=46 // pred_check_branch
          %64 = sbr.rel target = $region55
        $region54: #{_lambda_.6} parent=46 // pred_region
          %s66 = ssub.s32 256, 1
          loop: start=0, step=1, limit=1
          $region56: #{_lambda_.6} parent=54 // loop_pre_header
            _
          $region57: #{_lambda_.6} parent=54 // loop_header
            %s68 = sphi 0, %s72
            %p69 = scmp.ge.s32.totalorder %s68, 1
            %s73 = sphi %s58, %s58
            %s74 = sphi [#allocation3], [#allocation3]
          $region58: #{_lambda_.6} parent=54 // loop_header_branch
            %71 = sbr.rel (%p69) target = $region62
          $region59: #{_lambda_.6} parent=54 // loop_body
            %v75 = vld [vmem:[%s73] sm:%s66]
            %76 = vst [vmem:[%s74] sm:%s66] %v75
            %v77 = vld [vmem:[%s73 + $0x10] sm:%s66]
            %78 = vst [vmem:[%s74 + $0x8] sm:%s66] %v77
          $region60: #{_lambda_.6} parent=54 // loop_footer
            %s72 = sadd.s32 1, %s68
          $region61: #{_lambda_.6} parent=54 // loop_footer_branch
            %67 = sbr.rel target = $region57
          $region62: #{_lambda_.6} parent=54 // loop_exit
            _
        $region55: #{_lambda_.6} parent=46 // pred_fallthru
          _
      $region47: #{_lambda_.6} parent=42 // pred_fallthru
        _
      %95 = vnop
    $region43: #{_lambda_.6} parent=1 // pred_fallthru
      _
    // Predicated region
    $region78: #{_lambda_.6} parent=1 // pred_check
      _
    $region79: #{_lambda_.6} parent=1 // pred_check_branch
      %97 = sbr.rel (0) target = $region81
    $region80: #{_lambda_.6} parent=1 // pred_region
      // Predicated region
      $region82: #{_lambda_.6} parent=80 // pred_check
        _
      $region83: #{_lambda_.6} parent=80 // pred_check_branch
        %99 = sbr.rel (0) target = $region85
      $region84: #{_lambda_.6} parent=80 // pred_region
        // Predicated region
        $region86: #{_lambda_.6} parent=84 // pred_check
          _
        $region87: #{_lambda_.6} parent=84 // pred_check_branch
          %101 = sbr.rel (0) target = $region89
        $region88: #{_lambda_.6} parent=84 // pred_region
          // Predicated region
          $region101: #{_lambda_.6} parent=88 // pred_check
            _
          $region102: #{_lambda_.6} parent=88 // pred_check_branch
            %119 = sbr.rel (0) target = $region104
          $region103: #{_lambda_.6} parent=88 // pred_region
            loop: start=0, step=1, limit=1
            $region105: #{_lambda_.6} parent=103 // loop_pre_header
              _
            $region106: #{_lambda_.6} parent=103 // loop_header
              %s121 = sphi 0, %s125
              %p122 = scmp.ge.s32.totalorder %s121, 1
              %s126 = sphi %s2, %s2
              %s127 = sphi [#allocation4], [#allocation4]
            $region107: #{_lambda_.6} parent=103 // loop_header_branch
              %124 = sbr.rel (%p122) target = $region111
            $region108: #{_lambda_.6} parent=103 // loop_body
              %v128 = vld [vmem:[%s126] sm:$0xff]
              %129 = vst [vmem:[%s127] sm:$0xff] %v128
              %v130 = vld [vmem:[%s126 + $0x10] sm:$0xff]
              %131 = vst [vmem:[%s127 + $0x8] sm:$0xff] %v130
            $region109: #{_lambda_.6} parent=103 // loop_footer
              %s125 = sadd.s32 1, %s121
            $region110: #{_lambda_.6} parent=103 // loop_footer_branch
              %120 = sbr.rel target = $region106
            $region111: #{_lambda_.6} parent=103 // loop_exit
              _
          $region104: #{_lambda_.6} parent=88 // pred_fallthru
            _
          // Predicated region
          $region112: #{_lambda_.6} parent=88 // pred_check
            _
          $region113: #{_lambda_.6} parent=88 // pred_check_branch
            %133 = sbr.rel target = $region115
          $region114: #{_lambda_.6} parent=88 // pred_region
            _
          $region115: #{_lambda_.6} parent=88 // pred_fallthru
            _
        $region89: #{_lambda_.6} parent=84 // pred_fallthru
          _
        // Predicated region
        $region90: #{_lambda_.6} parent=84 // pred_check
          _
        $region91: #{_lambda_.6} parent=84 // pred_check_branch
          %103 = sbr.rel target = $region93
        $region92: #{_lambda_.6} parent=84 // pred_region
          %s105 = ssub.s32 256, 1
          loop: start=0, step=1, limit=1
          $region94: #{_lambda_.6} parent=92 // loop_pre_header
            _
          $region95: #{_lambda_.6} parent=92 // loop_header
            %s107 = sphi 0, %s111
            %p108 = scmp.ge.s32.totalorder %s107, 1
            %s112 = sphi %s2, %s2
            %s113 = sphi [#allocation4], [#allocation4]
          $region96: #{_lambda_.6} parent=92 // loop_header_branch
            %110 = sbr.rel (%p108) target = $region100
          $region97: #{_lambda_.6} parent=92 // loop_body
            %v114 = vld [vmem:[%s112] sm:%s105]
            %115 = vst [vmem:[%s113] sm:%s105] %v114
            %v116 = vld [vmem:[%s112 + $0x10] sm:%s105]
            %117 = vst [vmem:[%s113 + $0x8] sm:%s105] %v116
          $region98: #{_lambda_.6} parent=92 // loop_footer
            %s111 = sadd.s32 1, %s107
          $region99: #{_lambda_.6} parent=92 // loop_footer_branch
            %106 = sbr.rel target = $region95
          $region100: #{_lambda_.6} parent=92 // loop_exit
            _
        $region93: #{_lambda_.6} parent=84 // pred_fallthru
          _
      $region85: #{_lambda_.6} parent=80 // pred_fallthru
        _
      %134 = vnop
    $region81: #{_lambda_.6} parent=1 // pred_fallthru
      _
    // Predicated region
    $region116: #{_lambda_.6} parent=1 // pred_check
      _
    $region117: #{_lambda_.6} parent=1 // pred_check_branch
      %136 = sbr.rel (0) target = $region119
    $region118: #{_lambda_.6} parent=1 // pred_region
      %s137 = sadd.s32 0, 1
      %s138 = smul.addr %s137, 8
      %s139 = scalar_lea.vmem %s3, %s138
      // Predicated region
      $region120: #{_lambda_.6} parent=118 // pred_check
        _
      $region121: #{_lambda_.6} parent=118 // pred_check_branch
        %141 = sbr.rel (0) target = $region123
      $region122: #{_lambda_.6} parent=118 // pred_region
        // Predicated region
        $region124: #{_lambda_.6} parent=122 // pred_check
          _
        $region125: #{_lambda_.6} parent=122 // pred_check_branch
          %143 = sbr.rel (0) target = $region127
        $region126: #{_lambda_.6} parent=122 // pred_region
          // Predicated region
          $region139: #{_lambda_.6} parent=126 // pred_check
            _
          $region140: #{_lambda_.6} parent=126 // pred_check_branch
            %161 = sbr.rel (0) target = $region142
          $region141: #{_lambda_.6} parent=126 // pred_region
            loop: start=0, step=1, limit=1
            $region143: #{_lambda_.6} parent=141 // loop_pre_header
              _
            $region144: #{_lambda_.6} parent=141 // loop_header
              %s163 = sphi 0, %s167
              %p164 = scmp.ge.s32.totalorder %s163, 1
              %s168 = sphi %s139, %s139
              %s169 = sphi [#allocation5], [#allocation5]
            $region145: #{_lambda_.6} parent=141 // loop_header_branch
              %166 = sbr.rel (%p164) target = $region149
            $region146: #{_lambda_.6} parent=141 // loop_body
              %v170 = vld [vmem:[%s168] sm:$0xff]
              %171 = vst [vmem:[%s169] sm:$0xff] %v170
              %v172 = vld [vmem:[%s168 + $0x10] sm:$0xff]
              %173 = vst [vmem:[%s169 + $0x8] sm:$0xff] %v172
            $region147: #{_lambda_.6} parent=141 // loop_footer
              %s167 = sadd.s32 1, %s163
            $region148: #{_lambda_.6} parent=141 // loop_footer_branch
              %162 = sbr.rel target = $region144
            $region149: #{_lambda_.6} parent=141 // loop_exit
              _
          $region142: #{_lambda_.6} parent=126 // pred_fallthru
            _
          // Predicated region
          $region150: #{_lambda_.6} parent=126 // pred_check
            _
          $region151: #{_lambda_.6} parent=126 // pred_check_branch
            %175 = sbr.rel target = $region153
          $region152: #{_lambda_.6} parent=126 // pred_region
            _
          $region153: #{_lambda_.6} parent=126 // pred_fallthru
            _
        $region127: #{_lambda_.6} parent=122 // pred_fallthru
          _
        // Predicated region
        $region128: #{_lambda_.6} parent=122 // pred_check
          _
        $region129: #{_lambda_.6} parent=122 // pred_check_branch
          %145 = sbr.rel target = $region131
        $region130: #{_lambda_.6} parent=122 // pred_region
          %s147 = ssub.s32 256, 1
          loop: start=0, step=1, limit=1
          $region132: #{_lambda_.6} parent=130 // loop_pre_header
            _
          $region133: #{_lambda_.6} parent=130 // loop_header
            %s149 = sphi 0, %s153
            %p150 = scmp.ge.s32.totalorder %s149, 1
            %s154 = sphi %s139, %s139
            %s155 = sphi [#allocation5], [#allocation5]
          $region134: #{_lambda_.6} parent=130 // loop_header_branch
            %152 = sbr.rel (%p150) target = $region138
          $region135: #{_lambda_.6} parent=130 // loop_body
            %v156 = vld [vmem:[%s154] sm:%s147]
            %157 = vst [vmem:[%s155] sm:%s147] %v156
            %v158 = vld [vmem:[%s154 + $0x10] sm:%s147]
            %159 = vst [vmem:[%s155 + $0x8] sm:%s147] %v158
          $region136: #{_lambda_.6} parent=130 // loop_footer
            %s153 = sadd.s32 1, %s149
          $region137: #{_lambda_.6} parent=130 // loop_footer_branch
            %148 = sbr.rel target = $region133
          $region138: #{_lambda_.6} parent=130 // loop_exit
            _
        $region131: #{_lambda_.6} parent=122 // pred_fallthru
          _
      $region123: #{_lambda_.6} parent=118 // pred_fallthru
        _
      %176 = vnop
    $region119: #{_lambda_.6} parent=1 // pred_fallthru
      _
    // Predicated region
    $region154: #{_lambda_.6} parent=1 // pred_check
      _
    $region155: #{_lambda_.6} parent=1 // pred_check_branch
      %178 = sbr.rel (0) target = $region157
    $region156: #{_lambda_.6} parent=1 // pred_region
      _
    $region157: #{_lambda_.6} parent=1 // pred_fallthru
      _
    // Predicated region
    $region158: #{_lambda_.6} parent=1 // pred_check
      _
    $region159: #{_lambda_.6} parent=1 // pred_check_branch
      %180 = sbr.rel (0) target = $region161
    $region160: #{_lambda_.6} parent=1 // pred_region
      _
    $region161: #{_lambda_.6} parent=1 // pred_fallthru
      _
    // Predicated region
    $region162: #{_lambda_.6} parent=1 // pred_check
      _
    $region163: #{_lambda_.6} parent=1 // pred_check_branch
      %182 = sbr.rel (0) target = $region165
    $region164: #{_lambda_.6} parent=1 // pred_region
      _
    $region165: #{_lambda_.6} parent=1 // pred_fallthru
      _
    // Predicated region
    $region166: #{_lambda_.6} parent=1 // pred_check
      _
    $region167: #{_lambda_.6} parent=1 // pred_check_branch
      %184 = sbr.rel (0) target = $region169
    $region168: #{_lambda_.6} parent=1 // pred_region
      _
    $region169: #{_lambda_.6} parent=1 // pred_fallthru
      _
    // Predicated region
    $region170: #{_lambda_.6} parent=1 // pred_check
      _
    $region171: #{_lambda_.6} parent=1 // pred_check_branch
      %186 = sbr.rel (0) target = $region173
    $region172: #{_lambda_.6} parent=1 // pred_region
      _
    $region173: #{_lambda_.6} parent=1 // pred_fallthru
      _
    // Predicated region
    $region174: #{_lambda_.6} parent=1 // pred_check
      _
    $region175: #{_lambda_.6} parent=1 // pred_check_branch
      %188 = sbr.rel (0) target = $region177
    $region176: #{_lambda_.6} parent=1 // pred_region
      _
    $region177: #{_lambda_.6} parent=1 // pred_fallthru
      _
    // Predicated region
    $region178: #{_lambda_.6} parent=1 // pred_check
      _
    $region179: #{_lambda_.6} parent=1 // pred_check_branch
      %190 = sbr.rel (0) target = $region181
    $region180: #{_lambda_.6} parent=1 // pred_region
      _
    $region181: #{_lambda_.6} parent=1 // pred_fallthru
      _
    %s191 = sadd.s32 0, 1
    %s192 = sadd.s32 0, 1
    %v193 = vld [vmem:[#allocation2] sm:$0xff]
    %v194 = vld [vmem:[#allocation2 + $0x8] sm:$0xff]
    %v195 = vld [vmem:[#allocation3] sm:$0xff]
    %v196 = vld [vmem:[#allocation3 + $0x8] sm:$0xff]
    %197 = vrot.lane.b32.xlu0 %v193, 127
    %v198 = vpop.permute.xlu0 %197
    %199 = vrot.lane.b32.xlu0 %v194, 127
    %v200 = vpop.permute.xlu0 %199
    %201 = vrot.lane.b32.xlu0 %v195, 127
    %v202 = vpop.permute.xlu0 %201
    %203 = vrot.lane.b32.xlu0 %v196, 127
    %v204 = vpop.permute.xlu0 %203
    %v205 = vlaneseq
    %v206 = vand.u32 %v205, 127
    %vm207 = vcmp.lt.s32.totalorder %v206, 127
    %v208 = vsel %vm207, %v198, %v202
    %v209 = vsel %vm207, %v200, %v204
    %210 = vrot.lane.b32.xlu0 %v193, 126
    %v211 = vpop.permute.xlu0 %210
    %212 = vrot.lane.b32.xlu0 %v194, 126
    %v213 = vpop.permute.xlu0 %212
    %214 = vrot.lane.b32.xlu0 %v195, 126
    %v215 = vpop.permute.xlu0 %214
    %216 = vrot.lane.b32.xlu0 %v196, 126
    %v217 = vpop.permute.xlu0 %216
    %vm218 = vcmp.lt.s32.totalorder %v206, 126
    %v219 = vsel %vm218, %v211, %v215
    %v220 = vsel %vm218, %v213, %v217
    %221 = vrot.lane.b32.xlu0 %v193, 125
    %v222 = vpop.permute.xlu0 %221
    %223 = vrot.lane.b32.xlu0 %v194, 125
    %v224 = vpop.permute.xlu0 %223
    %225 = vrot.lane.b32.xlu0 %v195, 125
    %v226 = vpop.permute.xlu0 %225
    %227 = vrot.lane.b32.xlu0 %v196, 125
    %v228 = vpop.permute.xlu0 %227
    %vm229 = vcmp.lt.s32.totalorder %v206, 125
    %v230 = vsel %vm229, %v222, %v226
    %v231 = vsel %vm229, %v224, %v228
    %v232 = vld [vmem:[#allocation4] sm:$0xff]
    %v233 = vld [vmem:[#allocation4 + $0x8] sm:$0xff]
    %v234 = vld [vmem:[#allocation5] sm:$0xff]
    %v235 = vld [vmem:[#allocation5 + $0x8] sm:$0xff]
    %236 = vrot.lane.b32.xlu0 %v232, 127
    %v237 = vpop.permute.xlu0 %236
    %238 = vrot.lane.b32.xlu0 %v233, 127
    %v239 = vpop.permute.xlu0 %238
    %240 = vrot.lane.b32.xlu0 %v234, 127
    %v241 = vpop.permute.xlu0 %240
    %242 = vrot.lane.b32.xlu0 %v235, 127
    %v243 = vpop.permute.xlu0 %242
    %v244 = vsel %vm207, %v237, %v241
    %v245 = vsel %vm207, %v239, %v243
    %246 = vrot.lane.b32.xlu0 %v232, 126
    %v247 = vpop.permute.xlu0 %246
    %248 = vrot.lane.b32.xlu0 %v233, 126
    %v249 = vpop.permute.xlu0 %248
    %250 = vrot.lane.b32.xlu0 %v234, 126
    %v251 = vpop.permute.xlu0 %250
    %252 = vrot.lane.b32.xlu0 %v235, 126
    %v253 = vpop.permute.xlu0 %252
    %v254 = vsel %vm218, %v247, %v251
    %v255 = vsel %vm218, %v249, %v253
    %256 = vrot.lane.b32.xlu0 %v232, 125
    %v257 = vpop.permute.xlu0 %256
    %258 = vrot.lane.b32.xlu0 %v233, 125
    %v259 = vpop.permute.xlu0 %258
    %260 = vrot.lane.b32.xlu0 %v234, 125
    %v261 = vpop.permute.xlu0 %260
    %262 = vrot.lane.b32.xlu0 %v235, 125
    %v263 = vpop.permute.xlu0 %262
    %v264 = vsel %vm229, %v257, %v261
    %v265 = vsel %vm229, %v259, %v263
    %v266 = vld [vmem:[%s5] sm:$0xff]
    %v267 = vld [vmem:[%s5 + $0x8] sm:$0xff]
    %v268 = vld [vmem:[%s5 + $0x10] sm:$0xff]
    %v269 = vld [vmem:[%s5 + $0x18] sm:$0xff]
    %v270 = vld [vmem:[%s5 + $0x20] sm:$0xff]
    %v271 = vld [vmem:[%s5 + $0x28] sm:$0xff]
    %v272 = vld [vmem:[%s5 + $0x30] sm:$0xff]
    %v273 = vld [vmem:[%s5 + $0x38] sm:$0xff]
    %v274 = vld [vmem:[%s5 + $0x40] sm:$0xff]
    %v275 = vld [vmem:[%s5 + $0x48] sm:$0xff]
    %vm276 = vcmask 523264
    %v278 = vsel %vm276, %v266, 0
    %v281 = vsel %vm276, %v267, 0
    %v284 = vsel %vm276, %v268, 0
    %v287 = vsel %vm276, %v269, 0
    %v290 = vsel %vm276, %v270, 0
    %v293 = vsel %vm276, %v271, 0
    %v296 = vsel %vm276, %v272, 0
    %v299 = vsel %vm276, %v273, 0
    %v302 = vsel %vm276, %v274, 0
    %v305 = vsel %vm276, %v275, 0
    %307 = vmatprep.subr.mxu0 0.0
    %308 = vmatpush1.msra.mxu0 0.0
    %309 = vmatprep.subr.mxu0 0.0
    %310 = vmatpush1.msra.mxu0 0.0
    %311 = vmatprep.subr.mxu0 0.0
    %312 = vmatpush1.msra.mxu0 0.0
    %313 = vmatprep.subr.mxu0 0.0
    %314 = vmatpush1.msra.mxu0 0.0
    %315 = vmatprep.subr.mxu0 0.0
    %316 = vmatpush1.msra.mxu0 0.0
    %317 = vmatprep.subr.mxu0 0.0
    %318 = vmatpush1.msra.mxu0 0.0
    %319 = vmatprep.subr.mxu0 0.0
    %320 = vmatpush1.msra.mxu0 0.0
    %321 = vmatprep.subr.mxu0 0.0
    %322 = vmatpush1.msra.mxu0 0.0
    %323 = vmatprep.subr.mxu0 %v265
    %324 = vmatpush1.msra.mxu0 %v231
    %325 = vmatprep.subr.mxu0 %v264
    %326 = vmatpush1.msra.mxu0 %v230
    %327 = vmatprep.subr.mxu0 %v255
    %328 = vmatpush1.msra.mxu0 %v220
    %329 = vmatprep.subr.mxu0 %v254
    %330 = vmatpush1.msra.mxu0 %v219
    %331 = vmatprep.subr.mxu0 %v245
    %332 = vmatpush1.msra.mxu0 %v209
    %333 = vmatprep.subr.mxu0 %v244
    %334 = vmatpush1.msra.mxu0 %v208
    %335 = vmatprep.subr.mxu0 %v233
    %336 = vmatpush1.msra.mxu0 %v194
    %337 = vmatprep.subr.mxu0 %v232
    %338 = vmatpush1.msra.mxu0 %v193
    %339 = vmatprep.subr.mxu0 0.0
    %340 = vmatpush2.msra.mxu0 0.0
    %341 = vmatprep.subr.mxu0 0.0
    %342 = vmatpush2.msra.mxu0 0.0
    %343 = vmatprep.subr.mxu0 0.0
    %344 = vmatpush2.msra.mxu0 0.0
    %345 = vmatprep.subr.mxu0 0.0
    %346 = vmatpush2.msra.mxu0 0.0
    %347 = vmatprep.subr.mxu0 0.0
    %348 = vmatpush2.msra.mxu0 0.0
    %349 = vmatprep.subr.mxu0 0.0
    %350 = vmatpush2.msra.mxu0 0.0
    %351 = vmatprep.subr.mxu0 0.0
    %352 = vmatpush2.msra.mxu0 0.0
    %353 = vmatprep.subr.mxu0 0.0
    %354 = vmatpush2.msra.mxu0 0.0
    %355 = vmatprep.subr.mxu0 0.0
    %356 = vmatpush2.msra.mxu0 0.0
    %357 = vmatprep.subr.mxu0 0.0
    %358 = vmatpush2.msra.mxu0 0.0
    %359 = vmatprep.subr.mxu0 0.0
    %360 = vmatpush2.msra.mxu0 0.0
    %361 = vmatprep.subr.mxu0 0.0
    %362 = vmatpush2.msra.mxu0 0.0
    %363 = vmatprep.subr.mxu0 0.0
    %364 = vmatpush2.msra.mxu0 0.0
    %365 = vmatprep.subr.mxu0 0.0
    %366 = vmatpush2.msra.mxu0 0.0
    %367 = vmatprep.subr.mxu0 0.0
    %368 = vmatpush2.msra.mxu0 0.0
    %369 = vmatprep.subr.mxu0 0.0
    %370 = vmatpush2.msra.mxu0 0.0
    %371 = vmatprep.mubr.f32.mxu0 0.0
    %372 = vmatmul.mubr.f32.gmra.mxu0 %v278
    %v373 = vpop.f32.mrf.mxu0
    %v374 = vadd.f32 0.0, %v373
    %v375 = vpop.f32.mrf.mxu0
    %v376 = vadd.f32 0.0, %v375
    %377 = vmatprep.mubr.f32.mxu0 0.0
    %378 = vmatmul.mubr.f32.gmra.mxu0 %v281
    %v379 = vpop.f32.mrf.mxu0
    %v380 = vadd.f32 0.0, %v379
    %v381 = vpop.f32.mrf.mxu0
    %v382 = vadd.f32 0.0, %v381
    %383 = vmatprep.mubr.f32.mxu0 0.0
    %384 = vmatmul.mubr.f32.gmra.mxu0 %v284
    %v385 = vpop.f32.mrf.mxu0
    %v386 = vadd.f32 0.0, %v385
    %v387 = vpop.f32.mrf.mxu0
    %v388 = vadd.f32 0.0, %v387
    %389 = vmatprep.mubr.f32.mxu0 0.0
    %390 = vmatmul.mubr.f32.gmra.mxu0 %v287
    %v391 = vpop.f32.mrf.mxu0
    %v392 = vadd.f32 0.0, %v391
    %v393 = vpop.f32.mrf.mxu0
    %v394 = vadd.f32 0.0, %v393
    %395 = vmatprep.mubr.f32.mxu0 0.0
    %396 = vmatmul.mubr.f32.gmra.mxu0 %v290
    %v397 = vpop.f32.mrf.mxu0
    %v398 = vadd.f32 0.0, %v397
    %v399 = vpop.f32.mrf.mxu0
    %v400 = vadd.f32 0.0, %v399
    %401 = vmatprep.mubr.f32.mxu0 0.0
    %402 = vmatmul.mubr.f32.gmra.mxu0 %v293
    %v403 = vpop.f32.mrf.mxu0
    %v404 = vadd.f32 0.0, %v403
    %v405 = vpop.f32.mrf.mxu0
    %v406 = vadd.f32 0.0, %v405
    %407 = vmatprep.mubr.f32.mxu0 0.0
    %408 = vmatmul.mubr.f32.gmra.mxu0 %v296
    %v409 = vpop.f32.mrf.mxu0
    %v410 = vadd.f32 0.0, %v409
    %v411 = vpop.f32.mrf.mxu0
    %v412 = vadd.f32 0.0, %v411
    %413 = vmatprep.mubr.f32.mxu0 0.0
    %414 = vmatmul.mubr.f32.gmra.mxu0 %v299
    %v415 = vpop.f32.mrf.mxu0
    %v416 = vadd.f32 0.0, %v415
    %v417 = vpop.f32.mrf.mxu0
    %v418 = vadd.f32 0.0, %v417
    %419 = vmatprep.mubr.f32.mxu0 0.0
    %420 = vmatmul.mubr.f32.gmra.mxu0 %v302
    %v421 = vpop.f32.mrf.mxu0
    %v422 = vadd.f32 0.0, %v421
    %v423 = vpop.f32.mrf.mxu0
    %v424 = vadd.f32 0.0, %v423
    %425 = vmatprep.mubr.f32.mxu0 0.0
    %426 = vmatmul.mubr.f32.gmra.mxu0 %v305
    %v427 = vpop.f32.mrf.mxu0
    %v428 = vadd.f32 0.0, %v427
    %v429 = vpop.f32.mrf.mxu0
    %v430 = vadd.f32 0.0, %v429
    %431 = vdwg.mxu0
    %v432 = vld [vmem:[%s4] sm:$0xff]
    %v433 = vld [vmem:[%s4 + $0x8] sm:$0xff]
    %v434 = vld [vmem:[%s4 + $0x10] sm:$0xff]
    %v435 = vld [vmem:[%s4 + $0x18] sm:$0xff]
    %v436 = vld [vmem:[%s4 + $0x20] sm:$0xff]
    %v437 = vld [vmem:[%s4 + $0x28] sm:$0xff]
    %v438 = vld [vmem:[%s4 + $0x30] sm:$0xff]
    %v439 = vld [vmem:[%s4 + $0x38] sm:$0xff]
    %v440 = vld [vmem:[%s4 + $0x40] sm:$0xff]
    %v441 = vld [vmem:[%s4 + $0x48] sm:$0xff]
    %443 = vset.pattern.permute.xlu0 0
    %444 = vperm.xlu0 %443, %v432
    %v445 = vpop.permute.xlu0 %444
    %448 = vset.pattern.permute.xlu0 0
    %449 = vperm.xlu0 %448, %v433
    %v450 = vpop.permute.xlu0 %449
    %453 = vset.pattern.permute.xlu0 0
    %454 = vperm.xlu0 %453, %v434
    %v455 = vpop.permute.xlu0 %454
    %458 = vset.pattern.permute.xlu0 0
    %459 = vperm.xlu0 %458, %v435
    %v460 = vpop.permute.xlu0 %459
    %463 = vset.pattern.permute.xlu0 0
    %464 = vperm.xlu0 %463, %v436
    %v465 = vpop.permute.xlu0 %464
    %468 = vset.pattern.permute.xlu0 0
    %469 = vperm.xlu0 %468, %v437
    %v470 = vpop.permute.xlu0 %469
    %473 = vset.pattern.permute.xlu0 0
    %474 = vperm.xlu0 %473, %v438
    %v475 = vpop.permute.xlu0 %474
    %478 = vset.pattern.permute.xlu0 0
    %479 = vperm.xlu0 %478, %v439
    %v480 = vpop.permute.xlu0 %479
    %483 = vset.pattern.permute.xlu0 0
    %484 = vperm.xlu0 %483, %v440
    %v485 = vpop.permute.xlu0 %484
    %488 = vset.pattern.permute.xlu0 0
    %489 = vperm.xlu0 %488, %v441
    %v490 = vpop.permute.xlu0 %489
    %v492 = vmul.f32 %v374, %v445
    %v493 = vmul.f32 %v380, %v450
    %v494 = vmul.f32 %v386, %v455
    %v495 = vmul.f32 %v392, %v460
    %v496 = vmul.f32 %v398, %v465
    %v497 = vmul.f32 %v404, %v470
    %v498 = vmul.f32 %v410, %v475
    %v499 = vmul.f32 %v416, %v480
    %v500 = vmul.f32 %v422, %v485
    %v501 = vmul.f32 %v428, %v490
    %v502 = vsub.f32 1.0, %v432
    %v503 = vsub.f32 1.0, %v433
    %v504 = vsub.f32 1.0, %v434
    %v505 = vsub.f32 1.0, %v435
    %v506 = vsub.f32 1.0, %v436
    %v507 = vsub.f32 1.0, %v437
    %v508 = vsub.f32 1.0, %v438
    %v509 = vsub.f32 1.0, %v439
    %v510 = vsub.f32 1.0, %v440
    %v511 = vsub.f32 1.0, %v441
    %513 = vset.pattern.permute.xlu0 0
    %514 = vperm.xlu0 %513, %v502
    %v515 = vpop.permute.xlu0 %514
    %518 = vset.pattern.permute.xlu0 0
    %519 = vperm.xlu0 %518, %v503
    %v520 = vpop.permute.xlu0 %519
    %523 = vset.pattern.permute.xlu0 0
    %524 = vperm.xlu0 %523, %v504
    %v525 = vpop.permute.xlu0 %524
    %528 = vset.pattern.permute.xlu0 0
    %529 = vperm.xlu0 %528, %v505
    %v530 = vpop.permute.xlu0 %529
    %533 = vset.pattern.permute.xlu0 0
    %534 = vperm.xlu0 %533, %v506
    %v535 = vpop.permute.xlu0 %534
    %538 = vset.pattern.permute.xlu0 0
    %539 = vperm.xlu0 %538, %v507
    %v540 = vpop.permute.xlu0 %539
    %543 = vset.pattern.permute.xlu0 0
    %544 = vperm.xlu0 %543, %v508
    %v545 = vpop.permute.xlu0 %544
    %548 = vset.pattern.permute.xlu0 0
    %549 = vperm.xlu0 %548, %v509
    %v550 = vpop.permute.xlu0 %549
    %553 = vset.pattern.permute.xlu0 0
    %554 = vperm.xlu0 %553, %v510
    %v555 = vpop.permute.xlu0 %554
    %558 = vset.pattern.permute.xlu0 0
    %559 = vperm.xlu0 %558, %v511
    %v560 = vpop.permute.xlu0 %559
    %v562 = vmul.f32 %v376, %v515
    %v563 = vmul.f32 %v382, %v520
    %v564 = vmul.f32 %v388, %v525
    %v565 = vmul.f32 %v394, %v530
    %v566 = vmul.f32 %v400, %v535
    %v567 = vmul.f32 %v406, %v540
    %v568 = vmul.f32 %v412, %v545
    %v569 = vmul.f32 %v418, %v550
    %v570 = vmul.f32 %v424, %v555
    %v571 = vmul.f32 %v430, %v560
    %v572 = vadd.f32 %v492, %v562
    %v573 = vadd.f32 %v493, %v563
    %v574 = vadd.f32 %v494, %v564
    %v575 = vadd.f32 %v495, %v565
    %v576 = vadd.f32 %v496, %v566
    %v577 = vadd.f32 %v497, %v567
    %v578 = vadd.f32 %v498, %v568
    %v579 = vadd.f32 %v499, %v569
    %v580 = vadd.f32 %v500, %v570
    %v581 = vadd.f32 %v501, %v571
    %v582 = vld [vmem:[%s6] sm:$0xff]
    %v583 = vld [vmem:[%s6 + $0x8] sm:$0xff]
    %v584 = vld [vmem:[%s6 + $0x10] sm:$0xff]
    %v585 = vld [vmem:[%s6 + $0x18] sm:$0xff]
    %v586 = vld [vmem:[%s6 + $0x20] sm:$0xff]
    %v587 = vld [vmem:[%s6 + $0x28] sm:$0xff]
    %v588 = vld [vmem:[%s6 + $0x30] sm:$0xff]
    %v589 = vld [vmem:[%s6 + $0x38] sm:$0xff]
    %vm590 = vcmask 654336
    %v592 = vsel %vm590, %v582, 0
    %v595 = vsel %vm590, %v583, 0
    %v598 = vsel %vm590, %v584, 0
    %v601 = vsel %vm590, %v585, 0
    %v604 = vsel %vm590, %v586, 0
    %v607 = vsel %vm590, %v587, 0
    %v610 = vsel %vm590, %v588, 0
    %v613 = vsel %vm590, %v589, 0
    %615 = vmatprep.subr.mxu0 0.0
    %616 = vmatpush1.msra.mxu0 0.0
    %617 = vmatprep.subr.mxu0 0.0
    %618 = vmatpush1.msra.mxu0 0.0
    %619 = vmatprep.subr.mxu0 0.0
    %620 = vmatpush1.msra.mxu0 0.0
    %621 = vmatprep.subr.mxu0 0.0
    %622 = vmatpush1.msra.mxu0 0.0
    %623 = vmatprep.subr.mxu0 0.0
    %624 = vmatpush1.msra.mxu0 0.0
    %625 = vmatprep.subr.mxu0 0.0
    %626 = vmatpush1.msra.mxu0 0.0
    %627 = vmatprep.subr.mxu0 0.0
    %628 = vmatpush1.msra.mxu0 %v581
    %629 = vmatprep.subr.mxu0 0.0
    %630 = vmatpush1.msra.mxu0 %v580
    %631 = vmatprep.subr.mxu0 0.0
    %632 = vmatpush1.msra.mxu0 %v579
    %633 = vmatprep.subr.mxu0 0.0
    %634 = vmatpush1.msra.mxu0 %v578
    %635 = vmatprep.subr.mxu0 0.0
    %636 = vmatpush1.msra.mxu0 %v577
    %637 = vmatprep.subr.mxu0 0.0
    %638 = vmatpush1.msra.mxu0 %v576
    %639 = vmatprep.subr.mxu0 0.0
    %640 = vmatpush1.msra.mxu0 %v575
    %641 = vmatprep.subr.mxu0 0.0
    %642 = vmatpush1.msra.mxu0 %v574
    %643 = vmatprep.subr.mxu0 0.0
    %644 = vmatpush1.msra.mxu0 %v573
    %645 = vmatprep.subr.mxu0 0.0
    %646 = vmatpush1.msra.mxu0 %v572
    %647 = vmatprep.subr.mxu0 0.0
    %648 = vmatpush2.msra.mxu0 0.0
    %649 = vmatprep.subr.mxu0 0.0
    %650 = vmatpush2.msra.mxu0 0.0
    %651 = vmatprep.subr.mxu0 0.0
    %652 = vmatpush2.msra.mxu0 0.0
    %653 = vmatprep.subr.mxu0 0.0
    %654 = vmatpush2.msra.mxu0 0.0
    %655 = vmatprep.subr.mxu0 0.0
    %656 = vmatpush2.msra.mxu0 0.0
    %657 = vmatprep.subr.mxu0 0.0
    %658 = vmatpush2.msra.mxu0 0.0
    %659 = vmatprep.subr.mxu0 0.0
    %660 = vmatpush2.msra.mxu0 0.0
    %661 = vmatprep.subr.mxu0 0.0
    %662 = vmatpush2.msra.mxu0 0.0
    %663 = vmatprep.subr.mxu0 0.0
    %664 = vmatpush2.msra.mxu0 0.0
    %665 = vmatprep.subr.mxu0 0.0
    %666 = vmatpush2.msra.mxu0 0.0
    %667 = vmatprep.subr.mxu0 0.0
    %668 = vmatpush2.msra.mxu0 0.0
    %669 = vmatprep.subr.mxu0 0.0
    %670 = vmatpush2.msra.mxu0 0.0
    %671 = vmatprep.subr.mxu0 0.0
    %672 = vmatpush2.msra.mxu0 0.0
    %673 = vmatprep.subr.mxu0 0.0
    %674 = vmatpush2.msra.mxu0 0.0
    %675 = vmatprep.subr.mxu0 0.0
    %676 = vmatpush2.msra.mxu0 0.0
    %677 = vmatprep.subr.mxu0 0.0
    %678 = vmatpush2.msra.mxu0 0.0
    %679 = vmatprep.mubr.f32.mxu0 0.0
    %680 = vmatmul.mubr.f32.gmra.mxu0 %v592
    %v681 = vpop.f32.mrf.mxu0
    %v682 = vadd.f32 0.0, %v681
    %v683 = vpop.f32.mrf.mxu0
    %684 = vmatprep.mubr.f32.mxu0 0.0
    %685 = vmatmul.mubr.f32.gmra.mxu0 %v595
    %v686 = vpop.f32.mrf.mxu0
    %v687 = vadd.f32 0.0, %v686
    %v688 = vpop.f32.mrf.mxu0
    %689 = vmatprep.mubr.f32.mxu0 0.0
    %690 = vmatmul.mubr.f32.gmra.mxu0 %v598
    %v691 = vpop.f32.mrf.mxu0
    %v692 = vadd.f32 0.0, %v691
    %v693 = vpop.f32.mrf.mxu0
    %694 = vmatprep.mubr.f32.mxu0 0.0
    %695 = vmatmul.mubr.f32.gmra.mxu0 %v601
    %v696 = vpop.f32.mrf.mxu0
    %v697 = vadd.f32 0.0, %v696
    %v698 = vpop.f32.mrf.mxu0
    %699 = vmatprep.mubr.f32.mxu0 0.0
    %700 = vmatmul.mubr.f32.gmra.mxu0 %v604
    %v701 = vpop.f32.mrf.mxu0
    %v702 = vadd.f32 0.0, %v701
    %v703 = vpop.f32.mrf.mxu0
    %704 = vmatprep.mubr.f32.mxu0 0.0
    %705 = vmatmul.mubr.f32.gmra.mxu0 %v607
    %v706 = vpop.f32.mrf.mxu0
    %v707 = vadd.f32 0.0, %v706
    %v708 = vpop.f32.mrf.mxu0
    %709 = vmatprep.mubr.f32.mxu0 0.0
    %710 = vmatmul.mubr.f32.gmra.mxu0 %v610
    %v711 = vpop.f32.mrf.mxu0
    %v712 = vadd.f32 0.0, %v711
    %v713 = vpop.f32.mrf.mxu0
    %714 = vmatprep.mubr.f32.mxu0 0.0
    %715 = vmatmul.mubr.f32.gmra.mxu0 %v613
    %v716 = vpop.f32.mrf.mxu0
    %v717 = vadd.f32 0.0, %v716
    %v718 = vpop.f32.mrf.mxu0
    %719 = vdwg.mxu0
    %s720 = smul.u32 0, 128
    %v721 = vstv %s720
    %v722 = vadd.s32 %v206, %v721
    %vm723 = vcmp.lt.s32.totalorder %v722, 31
    %v724 = vsel %vm723, 1, 0
    %v725 = vcvt.s32.f32 %v724
    %v726 = vmul.f32 %v682, %v725
    %v727 = vmul.f32 %v687, %v725
    %v728 = vmul.f32 %v692, %v725
    %v729 = vmul.f32 %v697, %v725
    %730 = vrot.lane.b32.xlu0 %v728, 1
    %v731 = vpop.permute.xlu0 %730
    %732 = vrot.lane.b32.xlu0 %v729, 1
    %v733 = vpop.permute.xlu0 %732
    %vm734 = vcmp.ge.s32.totalorder %v206, 1
    %v735 = vsel %vm734, %v731, 0.0
    %v736 = vsel %vm734, %v733, 0.0
    %v737 = vadd.f32 %v726, %v735
    %v738 = vadd.f32 %v727, %v736
    %vm739 = vcmp.lt.s32.totalorder %v206, 1
    %v740 = vsel %vm739, %v731, 0.0
    %v741 = vsel %vm739, %v733, 0.0
    %v742 = vadd.f32 %v740, 0.0
    %v743 = vadd.f32 %v741, 0.0
    %v744 = vmul.f32 %v702, %v725
    %v745 = vmul.f32 %v707, %v725
    %746 = vrot.lane.b32.xlu0 %v744, 2
    %v747 = vpop.permute.xlu0 %746
    %748 = vrot.lane.b32.xlu0 %v745, 2
    %v749 = vpop.permute.xlu0 %748
    %vm750 = vcmp.ge.s32.totalorder %v206, 2
    %v751 = vsel %vm750, %v747, 0.0
    %v752 = vsel %vm750, %v749, 0.0
    %v753 = vadd.f32 %v737, %v751
    %v754 = vadd.f32 %v738, %v752
    %vm755 = vcmp.lt.s32.totalorder %v206, 2
    %v756 = vsel %vm755, %v747, 0.0
    %v757 = vsel %vm755, %v749, 0.0
    %v758 = vadd.f32 %v742, %v756
    %v759 = vadd.f32 %v743, %v757
    %v760 = vmul.f32 %v712, %v725
    %v761 = vmul.f32 %v717, %v725
    %762 = vrot.lane.b32.xlu0 %v760, 3
    %v763 = vpop.permute.xlu0 %762
    %764 = vrot.lane.b32.xlu0 %v761, 3
    %v765 = vpop.permute.xlu0 %764
    %vm766 = vcmp.ge.s32.totalorder %v206, 3
    %v767 = vsel %vm766, %v763, 0.0
    %v768 = vsel %vm766, %v765, 0.0
    %v769 = vadd.f32 %v753, %v767
    %v770 = vadd.f32 %v754, %v768
    %vm771 = vcmp.lt.s32.totalorder %v206, 3
    %v772 = vsel %vm771, %v763, 0.0
    %v773 = vsel %vm771, %v765, 0.0
    %v774 = vadd.f32 %v758, %v772
    %v775 = vadd.f32 %v759, %v773
    %776 = vst [vmem:[%s7] sm:$0xff] %v769
    %777 = vst [vmem:[%s7 + $0x8] sm:$0xff] %v770
    %778 = vst [vmem:[#allocation6] sm:$0xff] %v774
    %779 = vst [vmem:[#allocation6 + $0x8] sm:$0xff] %v775
    // Predicated region
    $region182: #{_lambda_.6} parent=1 // pred_check
      _
    $region183: #{_lambda_.6} parent=1 // pred_check_branch
      %781 = sbr.rel (0) target = $region185
    $region184: #{_lambda_.6} parent=1 // pred_region
      _
    $region185: #{_lambda_.6} parent=1 // pred_fallthru
      _
    // Predicated region
    $region186: #{_lambda_.6} parent=1 // pred_check
      _
    $region187: #{_lambda_.6} parent=1 // pred_check_branch
      %783 = sbr.rel (0) target = $region189
    $region188: #{_lambda_.6} parent=1 // pred_region
      %s785 = ssub.s32 256, 256
      %786 = vsyncadd [#allocation7], %s785
      %s787 = sshll.u32 [#allocation6], 4
      %s788 = int_to_ptr.vmem [resolvable:$true] %s787
      %793 = dma.vmem_to_hbm [thread:$0]  %s788, 256, %s8, [#allocation7], 128, 128, 8
    $region189: #{_lambda_.6} parent=1 // pred_fallthru
      _
    // Predicated region
    $region190: #{_lambda_.6} parent=1 // pred_check
      _
    $region191: #{_lambda_.6} parent=1 // pred_check_branch
      %795 = sbr.rel (0) target = $region193
    $region192: #{_lambda_.6} parent=1 // pred_region
      _
    $region193: #{_lambda_.6} parent=1 // pred_fallthru
      _
    // Predicated region
    $region194: #{_lambda_.6} parent=1 // pred_check
      _
    $region195: #{_lambda_.6} parent=1 // pred_check_branch
      %797 = sbr.rel (0) target = $region197
    $region196: #{_lambda_.6} parent=1 // pred_region
      %798 = dma.done [#allocation7], 256
    $region197: #{_lambda_.6} parent=1 // pred_fallthru
      _
    %799 = vsyncpa [#allocation7], 1

</llo_original>
